<compile_context>
chip_gen: v6e
topology: v6e:2x2x1
jax: 0.10.0
libtpu: 0.0.40
codegen_flags: <defaults>
</compile_context>

<pallas_src>
import jax
import jax.numpy as jnp
from jax.experimental import pallas as pl
from jax.experimental.pallas import tpu as pltpu


# ---------------------------------------------------------------------------
# Pass 1: per-edge messages. Gather x[src]/x[dst] via one-hot @ x on the MXU
# (exact selection in bf16, f32 accumulation), add edge_attr, ReLU, store bf16.
# ---------------------------------------------------------------------------
def message_kernel(x_ref,                 # VMEM (N_pad, F_pad) bf16, resident gather source
                   s_ref, d_ref,          # VMEM (tile_e, N_pad) bf16 one-hot src / dst rows
                   ea_ref,                # VMEM (tile_e, F_pad) bf16
                   msg_in_ref, msg_out_ref):   # VMEM (tile_e, F_pad) bf16 outputs
    x = x_ref[...]
    ea = ea_ref[...].astype(jnp.float32)
    xj_src = jnp.dot(s_ref[...], x, preferred_element_type=jnp.float32)
    xj_dst = jnp.dot(d_ref[...], x, preferred_element_type=jnp.float32)
    msg_in_ref[...] = jnp.maximum(xj_src + ea, 0.0).astype(msg_in_ref.dtype)    # conv_in msg
    msg_out_ref[...] = jnp.maximum(xj_dst + ea, 0.0).astype(msg_out_ref.dtype)  # conv_out msg


# ---------------------------------------------------------------------------
# Pass 2: scatter-add.  aggr_in = D^T @ msg_in (sum at dst),
#                       aggr_out = S^T @ msg_out (sum at src).
# Output blocks stay resident across the "arbitrary" edge axis -> accumulate in place.
# ---------------------------------------------------------------------------
def scatter_kernel(st_ref, dt_ref,            # VMEM (tile_n, tile_e) bf16, pre-transposed
                   msg_in_ref, msg_out_ref,   # VMEM (tile_e, F_pad) bf16
                   aggr_in_ref, aggr_out_ref):  # VMEM (tile_n, F_pad) f32 resident outputs
    e = pl.program_id(1)

    @pl.when(e == 0)
    def _():
        aggr_in_ref[...] = jnp.zeros_like(aggr_in_ref)
        aggr_out_ref[...] = jnp.zeros_like(aggr_out_ref)

    aggr_in_ref[...] += jnp.dot(dt_ref[...], msg_in_ref[...],
                                preferred_element_type=jnp.float32)
    aggr_out_ref[...] += jnp.dot(st_ref[...], msg_out_ref[...],
                                 preferred_element_type=jnp.float32)


# ---------------------------------------------------------------------------
# Pass 3: node-wise finalize: h = MLP((1+eps)*x + aggr); out = a*h_out + (1-a)*h_in + Lin(x).
# ---------------------------------------------------------------------------
def finalize_kernel(scal_ref,                         # SMEM (3,) f32: [alpha, eps_in, eps_out]
                    x_ref, aggr_in_ref, aggr_out_ref,  # VMEM (tile_n, F_pad)
                    w1i_ref, b1i_ref, w2i_ref, b2i_ref,
                    w1o_ref, b1o_ref, w2o_ref, b2o_ref,
                    wl_ref, bl_ref,
                    out_ref):                          # VMEM (tile_n, F_pad) f32
    alpha = scal_ref[0]
    eps_in = scal_ref[1]
    eps_out = scal_ref[2]

    x = x_ref[...]
    x_f32 = x.astype(jnp.float32)

    def mlp(h, w1_ref, b1_ref, w2_ref, b2_ref):
        h1 = jnp.dot(h.astype(jnp.bfloat16), w1_ref[...],
                     preferred_element_type=jnp.float32) + b1_ref[...]
        h1 = jnp.maximum(h1, 0.0)
        return jnp.dot(h1.astype(jnp.bfloat16), w2_ref[...],
                       preferred_element_type=jnp.float32) + b2_ref[...]

    h_in = mlp((1.0 + eps_in) * x_f32 + aggr_in_ref[...],
               w1i_ref, b1i_ref, w2i_ref, b2i_ref)
    h_out = mlp((1.0 + eps_out) * x_f32 + aggr_out_ref[...],
                w1o_ref, b1o_ref, w2o_ref, b2o_ref)

    out = alpha * h_out + (1.0 - alpha) * h_in
    # root_weight self-loop transform: Linear(F, F)
    out = out + jnp.dot(x, wl_ref[...], preferred_element_type=jnp.float32) + bl_ref[...]
    out_ref[...] = out.astype(out_ref.dtype)


def _round_up(v, m):
    return (v + m - 1) // m * m


def _pad2(a, rows, cols, dtype):
    return jnp.pad(a, ((0, rows - a.shape[0]), (0, cols - a.shape[1]))).astype(dtype)


def _vmem_limit(step_bytes, cap=48 * 1024 * 1024):
    # double-buffered pipeline blocks + compiler headroom; capped below v7x's 64 MiB/TC.
    return int(min(max(2 * step_bytes + (8 << 20), 16 << 20), cap))


def dir_gine_forward(x, edge_index, edge_attr, params,
                     alpha=0.5, eps_in=0.0, eps_out=0.0,
                     *, tile_n=256, tile_e=256):
    N, F = x.shape
    E = edge_attr.shape[0]
    H = params["w1_in"].shape[1]

    assert tile_n % 8 == 0 and tile_e % 128 == 0, (
        "tile_e is the lane dim of the scatter column blocks (multiple of 128 required); "
        "tile_n is a sublane dim (multiple of 8; 128/256 recommended for the MXU)")

    F_pad = _round_up(F, 128)
    H_pad = _round_up(H, 128)
    N_pad = _round_up(N, tile_n)
    E_pad = _round_up(E, tile_e)
    n_node_tiles = N_pad // tile_n
    n_edge_tiles = E_pad // tile_e

    # Guard against the O(E*N) dense one-hot formulation blowing HBM (see TODO above).
    assert E_pad * N_pad <= (1 << 28), "graph too large for the dense one-hot gather/scatter"

    # Padded edges get endpoint -1 -> all-zero one-hot row/column -> contribute nothing.
    src = jnp.full((E_pad,), -1, jnp.int32).at[:E].set(edge_index[0].astype(jnp.int32))
    dst = jnp.full((E_pad,), -1, jnp.int32).at[:E].set(edge_index[1].astype(jnp.int32))
    node_ids = jnp.arange(N_pad, dtype=jnp.int32)
    S = (src[:, None] == node_ids[None, :]).astype(jnp.bfloat16)    # [E_pad, N_pad] gather
    D = (dst[:, None] == node_ids[None, :]).astype(jnp.bfloat16)    # [E_pad, N_pad] gather
    ST = (node_ids[:, None] == src[None, :]).astype(jnp.bfloat16)   # [N_pad, E_pad] scatter
    DT = (node_ids[:, None] == dst[None, :]).astype(jnp.bfloat16)   # [N_pad, E_pad] scatter

    xp = _pad2(x, N_pad, F_pad, jnp.bfloat16)
    eap = _pad2(edge_attr, E_pad, F_pad, jnp.bfloat16)

    w1i = _pad2(params["w1_in"], F_pad, H_pad, jnp.bfloat16)
    b1i = _pad2(params["b1_in"], 1, H_pad, jnp.float32)
    w2i = _pad2(params["w2_in"], H_pad, F_pad, jnp.bfloat16)
    b2i = _pad2(params["b2_in"], 1, F_pad, jnp.float32)
    w1o = _pad2(params["w1_out"], F_pad, H_pad, jnp.bfloat16)
    b1o = _pad2(params["b1_out"], 1, H_pad, jnp.float32)
    w2o = _pad2(params["w2_out"], H_pad, F_pad, jnp.bfloat16)
    b2o = _pad2(params["b2_out"], 1, F_pad, jnp.float32)
    wl = _pad2(params["w_lin"], F_pad, F_pad, jnp.bfloat16)
    bl = _pad2(params["b_lin"], 1, F_pad, jnp.float32)

    scalars = jnp.array([alpha, eps_in, eps_out], jnp.float32)

    # ----- Pass 1: per-edge messages (gather runs once, not once per node tile). --------
    p1_step_bytes = (N_pad * F_pad * 2            # x gather source (resident)
                     + 2 * tile_e * N_pad * 2     # S, D gather tiles
                     + 3 * tile_e * F_pad * 2)    # edge_attr tile + two message output tiles
    msg_in, msg_out = pl.pallas_call(
        message_kernel,
        out_shape=(jax.ShapeDtypeStruct((E_pad, F_pad), jnp.bfloat16),
                   jax.ShapeDtypeStruct((E_pad, F_pad), jnp.bfloat16)),
        grid_spec=pltpu.PrefetchScalarGridSpec(
            num_scalar_prefetch=0,
            grid=(n_edge_tiles,),
            in_specs=[
                pl.BlockSpec((N_pad, F_pad), lambda e: (0, 0)),    # x (full, resident)
                pl.BlockSpec((tile_e, N_pad), lambda e: (e, 0)),   # S gather tile
                pl.BlockSpec((tile_e, N_pad), lambda e: (e, 0)),   # D gather tile
                pl.BlockSpec((tile_e, F_pad), lambda e: (e, 0)),   # edge_attr tile
            ],
            out_specs=[
                pl.BlockSpec((tile_e, F_pad), lambda e: (e, 0)),
                pl.BlockSpec((tile_e, F_pad), lambda e: (e, 0)),
            ],
        ),
        compiler_params=pltpu.CompilerParams(
            dimension_semantics=("parallel",),
            vmem_limit_bytes=_vmem_limit(p1_step_bytes),
        ),
    )(xp, S, D, eap)

    # ----- Pass 2: scatter-add; streamed inputs are O(E*F), independent of N_pad. --------
    p2_step_bytes = (2 * tile_n * tile_e * 2      # S^T, D^T column blocks
                     + 2 * tile_e * F_pad * 2     # msg_in, msg_out tiles
                     + 2 * tile_n * F_pad * 4)    # resident f32 aggregate output blocks
    aggr_in, aggr_out = pl.pallas_call(
        scatter_kernel,
        out_shape=(jax.ShapeDtypeStruct((N_pad, F_pad), jnp.float32),
                   jax.ShapeDtypeStruct((N_pad, F_pad), jnp.float32)),
        grid_spec=pltpu.PrefetchScalarGridSpec(
            num_scalar_prefetch=0,
            grid=(n_node_tiles, n_edge_tiles),
            in_specs=[
                pl.BlockSpec((tile_n, tile_e), lambda n, e: (n, e)),  # S^T column block
                pl.BlockSpec((tile_n, tile_e), lambda n, e: (n, e)),  # D^T column block
                pl.BlockSpec((tile_e, F_pad), lambda n, e: (e, 0)),   # msg_in tile
                pl.BlockSpec((tile_e, F_pad), lambda n, e: (e, 0)),   # msg_out tile
            ],
            out_specs=[
                pl.BlockSpec((tile_n, F_pad), lambda n, e: (n, 0)),
                pl.BlockSpec((tile_n, F_pad), lambda n, e: (n, 0)),
            ],
        ),
        compiler_params=pltpu.CompilerParams(
            dimension_semantics=("parallel", "arbitrary"),
            vmem_limit_bytes=_vmem_limit(p2_step_bytes),
        ),
    )(ST, DT, msg_in, msg_out)

    # ----- Pass 3: GIN MLPs + root Linear on node tiles (weights out of the hot loop). ---
    w_bytes = ((2 * (F_pad * H_pad + H_pad * F_pad) + F_pad * F_pad) * 2
               + (2 * (H_pad + F_pad) + F_pad) * 4)
    p3_step_bytes = tile_n * F_pad * 2 + 3 * tile_n * F_pad * 4 + w_bytes

    def const2(shape):
        return pl.BlockSpec(shape, lambda n: (0, 0))

    out = pl.pallas_call(
        finalize_kernel,
        out_shape=jax.ShapeDtypeStruct((N_pad, F_pad), jnp.float32),
        grid_spec=pltpu.PrefetchScalarGridSpec(
            num_scalar_prefetch=0,
            grid=(n_node_tiles,),
            in_specs=[
                pl.BlockSpec(memory_space=pltpu.MemorySpace.SMEM),   # [alpha, eps_in, eps_out]
                pl.BlockSpec((tile_n, F_pad), lambda n: (n, 0)),     # x node tile
                pl.BlockSpec((tile_n, F_pad), lambda n: (n, 0)),     # aggr_in tile
                pl.BlockSpec((tile_n, F_pad), lambda n: (n, 0)),     # aggr_out tile
                const2((F_pad, H_pad)), const2((1, H_pad)),          # w1_in, b1_in
                const2((H_pad, F_pad)), const2((1, F_pad)),          # w2_in, b2_in
                const2((F_pad, H_pad)), const2((1, H_pad)),          # w1_out, b1_out
                const2((H_pad, F_pad)), const2((1, F_pad)),          # w2_out, b2_out
                const2((F_pad, F_pad)), const2((1, F_pad)),          # w_lin, b_lin
            ],
            out_specs=pl.BlockSpec((tile_n, F_pad), lambda n: (n, 0)),
        ),
        compiler_params=pltpu.CompilerParams(
            dimension_semantics=("parallel",),
            vmem_limit_bytes=_vmem_limit(p3_step_bytes),
        ),
    )(scalars, xp, aggr_in, aggr_out,
      w1i, b1i, w2i, b2i, w1o, b1o, w2o, b2o, wl, bl)

    return out[:N, :F]


def reference(x, edge_index, edge_attr, params, alpha=0.5, eps_in=0.0, eps_out=0.0):
    """Pure-JAX reference of the same forward (segment-sum based)."""
    src, dst = edge_index[0], edge_index[1]
    N = x.shape[0]
    msg_in = jax.nn.relu(x[src] + edge_attr)
    aggr_in = jax.ops.segment_sum(msg_in, dst, num_segments=N)
    msg_out = jax.nn.relu(x[dst] + edge_attr)
    aggr_out = jax.ops.segment_sum(msg_out, src, num_segments=N)

    def mlp(h, w1, b1, w2, b2):
        return jax.nn.relu(h @ w1 + b1) @ w2 + b2

    h_in = mlp((1.0 + eps_in) * x + aggr_in,
               params["w1_in"], params["b1_in"], params["w2_in"], params["b2_in"])
    h_out = mlp((1.0 + eps_out) * x + aggr_out,
                params["w1_out"], params["b1_out"], params["w2_out"], params["b2_out"])
    out = alpha * h_out + (1.0 - alpha) * h_in
    return out + x @ params["w_lin"] + params["b_lin"]


def _linear_init(key, fan_in, fan_out):
    """PyTorch nn.Linear-style uniform(-1/sqrt(fan_in), 1/sqrt(fan_in)) init,
    stored pre-transposed as [in, out]; bias as [1, out] for broadcasting."""
    kw, kb = jax.random.split(key)
    bound = 1.0 / jnp.sqrt(fan_in)
    w = jax.random.uniform(kw, (fan_in, fan_out), jnp.float32, -bound, bound)
    b = jax.random.uniform(kb, (1, fan_out), jnp.float32, -bound, bound)
    return w, b


if __name__ == "__main__":
    N, F, E = 200, 32, 480     # nodes, feature dim, edges
    H = 2 * F                  # GIN MLP hidden dim

    key = jax.random.PRNGKey(0)
    keys = jax.random.split(key, 9)

    x = jax.random.normal(keys[0], (N, F), jnp.float32)
    edge_attr = jax.random.normal(keys[1], (E, F), jnp.float32)
    src = jax.random.randint(keys[2], (E,), 0, N, jnp.int32)
    dst = jax.random.randint(keys[3], (E,), 0, N, jnp.int32)
    edge_index = jnp.stack([src, dst], axis=0)   # [2, E]

    # conv_in MLP params, conv_out MLP params (independent after reset), root Linear.
    w1_in, b1_in = _linear_init(keys[4], F, H)
    w2_in, b2_in = _linear_init(keys[5], H, F)
    w1_out, b1_out = _linear_init(keys[6], F, H)
    w2_out, b2_out = _linear_init(keys[7], H, F)
    w_lin, b_lin = _linear_init(keys[8], F, F)

    params = dict(w1_in=w1_in, b1_in=b1_in, w2_in=w2_in, b2_in=b2_in,
                  w1_out=w1_out, b1_out=b1_out, w2_out=w2_out, b2_out=b2_out,
                  w_lin=w_lin, b_lin=b_lin)

    out = dir_gine_forward(x, edge_index, edge_attr, params, alpha=0.5)
    out = jax.block_until_ready(out)

    # Reference in f32 on bf16-rounded inputs/weights (the kernel computes bf16 on the MXU
    # with f32 accumulation; messages are rounded to bf16 before the scatter-add), so the
    # comparison isolates kernel correctness.
    def rnd(a):
        return a.astype(jnp.bfloat16).astype(jnp.float32)

    ref_params = {k: (rnd(v) if k.startswith("w") else v) for k, v in params.items()}
    ref = reference(rnd(x), edge_index, rnd(edge_attr), ref_params, alpha=0.5)

    assert out.shape == (N, F)
    max_err = float(jnp.max(jnp.abs(out - ref)))
    assert jnp.allclose(out, ref, rtol=5e-2, atol=5e-2), max_err

    print("KERNEL_OK")
</pallas_src>

<mosaic_0001>
module attributes {stable_mosaic.version = 11 : i64} {
  func.func @message_kernel(%arg0: i32, %arg1: memref<256x128xbf16, #tpu.memory_space<vmem>>, %arg2: memref<256x256xbf16, #tpu.memory_space<vmem>>, %arg3: memref<256x256xbf16, #tpu.memory_space<vmem>>, %arg4: memref<256x128xbf16, #tpu.memory_space<vmem>>, %arg5: memref<256x128xbf16, #tpu.memory_space<vmem>>, %arg6: memref<256x128xbf16, #tpu.memory_space<vmem>>) attributes {dimension_semantics = [#tpu.dimension_semantics<parallel>], iteration_bounds = array<i64: 2>, scalar_prefetch = 0 : i64, scratch_operands = 0 : i64, tpu.core_type = #tpu.core_type<tc>, window_params = [{pipeline_mode = #tpu.pipeline_mode<synchronous>, transform_indices = @transform_0, window_bounds = array<i64: 256, 128>}, {transform_indices = @transform_1, window_bounds = array<i64: 256, 256>}, {transform_indices = @transform_2, window_bounds = array<i64: 256, 256>}, {transform_indices = @transform_3, window_bounds = array<i64: 256, 128>}, {transform_indices = @transform_4, window_bounds = array<i64: 256, 128>}, {transform_indices = @transform_5, window_bounds = array<i64: 256, 128>}]} {
    %c0 = arith.constant 0 : index
    %c0_0 = arith.constant 0 : index
    %0 = vector.load %arg1[%c0, %c0_0] : memref<256x128xbf16, #tpu.memory_space<vmem>>, vector<256x128xbf16>
    %c0_1 = arith.constant 0 : index
    %c0_2 = arith.constant 0 : index
    %1 = vector.load %arg4[%c0_1, %c0_2] : memref<256x128xbf16, #tpu.memory_space<vmem>>, vector<256x128xbf16>
    %2 = arith.extf %1 : vector<256x128xbf16> to vector<256x128xf32>
    %c0_3 = arith.constant 0 : index
    %c0_4 = arith.constant 0 : index
    %3 = vector.load %arg2[%c0_3, %c0_4] : memref<256x256xbf16, #tpu.memory_space<vmem>>, vector<256x256xbf16>
    %cst = arith.constant dense<0.000000e+00> : vector<256x128xf32>
    %4 = tpu.matmul %3, %0, %cst {dimension_numbers = #tpu.dot_dimension_numbers<[1], [0], [0], [1], [0, 0, 1, 1], [], []>} : vector<256x256xbf16>, vector<256x128xbf16>, vector<256x128xf32> -> vector<256x128xf32>
    %c0_5 = arith.constant 0 : index
    %c0_6 = arith.constant 0 : index
    %5 = vector.load %arg3[%c0_5, %c0_6] : memref<256x256xbf16, #tpu.memory_space<vmem>>, vector<256x256xbf16>
    %cst_7 = arith.constant dense<0.000000e+00> : vector<256x128xf32>
    %6 = tpu.matmul %5, %0, %cst_7 {dimension_numbers = #tpu.dot_dimension_numbers<[1], [0], [0], [1], [0, 0, 1, 1], [], []>} : vector<256x256xbf16>, vector<256x128xbf16>, vector<256x128xf32> -> vector<256x128xf32>
    %7 = arith.addf %4, %2 : vector<256x128xf32>
    %cst_8 = arith.constant 0.000000e+00 : f32
    %8 = vector.broadcast %cst_8 : f32 to vector<256x128xf32>
    %9 = arith.maximumf %7, %8 : vector<256x128xf32>
    %10 = arith.truncf %9 : vector<256x128xf32> to vector<256x128xbf16>
    %c0_9 = arith.constant 0 : index
    %c0_10 = arith.constant 0 : index
    %11 = vector.load %arg5[%c0_9, %c0_10] : memref<256x128xbf16, #tpu.memory_space<vmem>>, vector<256x128xbf16>
    tpu.vector_store %arg5[%c0_9, %c0_10], %10 {strides = array<i32>} : memref<256x128xbf16, #tpu.memory_space<vmem>>, vector<256x128xbf16>,
    %12 = arith.addf %6, %2 : vector<256x128xf32>
    %cst_11 = arith.constant 0.000000e+00 : f32
    %13 = vector.broadcast %cst_11 : f32 to vector<256x128xf32>
    %14 = arith.maximumf %12, %13 : vector<256x128xf32>
    %15 = arith.truncf %14 : vector<256x128xf32> to vector<256x128xbf16>
    %c0_12 = arith.constant 0 : index
    %c0_13 = arith.constant 0 : index
    %16 = vector.load %arg6[%c0_12, %c0_13] : memref<256x128xbf16, #tpu.memory_space<vmem>>, vector<256x128xbf16>
    tpu.vector_store %arg6[%c0_12, %c0_13], %15 {strides = array<i32>} : memref<256x128xbf16, #tpu.memory_space<vmem>>, vector<256x128xbf16>,
    return
  }
  func.func @transform_0(%arg0: i32) -> (i32, i32) {
    %c0_i32 = arith.constant 0 : i32
    %c0_i32_0 = arith.constant 0 : i32
    %c0_i32_1 = arith.constant 0 : i32
    return %c0_i32, %c0_i32_0 : i32, i32
  }
  func.func @transform_1(%arg0: i32) -> (i32, i32) {
    %c0_i32 = arith.constant 0 : i32
    %c0_i32_0 = arith.constant 0 : i32
    return %arg0, %c0_i32 : i32, i32
  }
  func.func @transform_2(%arg0: i32) -> (i32, i32) {
    %c0_i32 = arith.constant 0 : i32
    %c0_i32_0 = arith.constant 0 : i32
    return %arg0, %c0_i32 : i32, i32
  }
  func.func @transform_3(%arg0: i32) -> (i32, i32) {
    %c0_i32 = arith.constant 0 : i32
    %c0_i32_0 = arith.constant 0 : i32
    return %arg0, %c0_i32 : i32, i32
  }
  func.func @transform_4(%arg0: i32) -> (i32, i32) {
    %c0_i32 = arith.constant 0 : i32
    %c0_i32_0 = arith.constant 0 : i32
    return %arg0, %c0_i32 : i32, i32
  }
  func.func @transform_5(%arg0: i32) -> (i32, i32) {
    %c0_i32 = arith.constant 0 : i32
    %c0_i32_0 = arith.constant 0 : i32
    return %arg0, %c0_i32 : i32, i32
  }
}

</mosaic_0001>

<llo_original>
// kernel: tpu_custom_call.1
$region0: #{tpu_custom_call.1}
  #allocation0 [shape = 'u32[]', space=smem, size = 0x4, offset = 0x4, fixed_abs, tag = 'smem constant byte address 0x4 - core index']
  #allocation1 [shape = 'u32[144,128]{1,0:T(1,128)}', space=vmem, size = 0x12000, scoped, tag = 'internal scratch']
  %s0 = inlined_call_operand.hbm [shape: bf16[256,128], index: 0, kind: input, shape index: {}]
  %s1 = inlined_call_operand.hbm [shape: bf16[512,256], index: 1, kind: input, shape index: {}]
  %s2 = inlined_call_operand.hbm [shape: bf16[512,256], index: 2, kind: input, shape index: {}]
  %s3 = inlined_call_operand.hbm [shape: bf16[512,128], index: 3, kind: input, shape index: {}]
  %s4 = inlined_call_operand.hbm [shape: bf16[512,128], index: 4, kind: output, shape index: {0}]
  %s5 = inlined_call_operand.hbm [shape: bf16[512,128], index: 5, kind: output, shape index: {1}]
  %6 = xla_tuple %s4, %s5
  %s7 = sld [smem:[#allocation0]]
  $region73: #{tpu_custom_call.1} parent=0
    _
  %s9 = ssub.s32 1, %s7
  %s10 = scalar_select 0, %s9, %s7
  $region1: #{tpu_custom_call.1} parent=0
    #allocation2 [shape = 'u8[65536]{0}', space=vmem, size = 0x10000, scoped, tag = 'input window, operand 0, single buffered']
    #allocation3 [shape = 's32[2]{0}', space=sflag, size = 0x8, scoped, tag = 'scoped memory for tpu_custom_call.1']
    #allocation4 [shape = 's32[2]{0}', space=sflag, size = 0x8, scoped, tag = 'scoped memory for tpu_custom_call.1']
    #allocation5 [shape = 'u8[262144]{0}', space=vmem, size = 0x40000, scoped, tag = 'input window, operand 1']
    #allocation6 [shape = 's32[2]{0}', space=sflag, size = 0x8, scoped, tag = 'scoped memory for tpu_custom_call.1']
    #allocation7 [shape = 'u8[262144]{0}', space=vmem, size = 0x40000, scoped, tag = 'input window, operand 2']
    #allocation8 [shape = 'u8[131072]{0}', space=vmem, size = 0x20000, scoped, tag = 'input window, operand 3']
    #allocation9 [shape = 's32[2]{0}', space=sflag, size = 0x8, scoped, tag = 'scoped memory for tpu_custom_call.1']
    #allocation10 [shape = 'u8[131072]{0}', space=vmem, size = 0x20000, scoped, tag = 'output window, operand 0']
    #allocation11 [shape = 'u8[131072]{0}', space=vmem, size = 0x20000, scoped, tag = 'output window, operand 1']
    #allocation12 [shape = 's32[2]{0}', space=sflag, size = 0x8, scoped, tag = 'scoped memory for tpu_custom_call.1']
    %11 = vsyncpa [#allocation3], 0
    %12 = vsyncpa [#allocation6], 0
    %s13 = scalar_lea.sflag [#allocation6], 1
    %14 = vsyncpa %s13, 0
    %15 = vsyncpa [#allocation9], 0
    %s16 = scalar_lea.sflag [#allocation9], 1
    %17 = vsyncpa %s16, 0
    %18 = vsyncpa [#allocation4], 0
    %s19 = scalar_lea.sflag [#allocation4], 1
    %20 = vsyncpa %s19, 0
    %21 = vsyncpa [#allocation12], 0
    %s22 = scalar_lea.sflag [#allocation12], 1
    %23 = vsyncpa %s22, 0
    loop: start=0, step=1, limit=4
    $region2: #{tpu_custom_call.1} parent=1 // loop_pre_header
      _
    $region3: #{tpu_custom_call.1} parent=1 // loop_header
      %s25 = sphi 0, %s29
      %p26 = scmp.ge.s32.totalorder %s25, 4
      %s33 = sphi 0, %s33
      %s35 = sphi 0, %s33
      %s36 = sphi 0, %s35
      %s50 = sphi 0, %s36
      %s56 = sphi 0, %s58
      %s59 = sphi 0, %s56
      %s60 = sphi 0, %s59
      %s76 = sphi 0, %s60
      %s82 = sphi 0, %s84
      %s85 = sphi 0, %s82
      %s86 = sphi 0, %s85
      %s102 = sphi 0, %s86
      %s108 = sphi 0, %s110
      %s111 = sphi 0, %s108
      %s112 = sphi 0, %s111
      %s128 = sphi 0, %s112
      %s134 = sphi 0, %s136
      %s137 = sphi 0, %s134
      %s138 = sphi 0, %s137
      %s154 = sphi 0, %s138
      %s160 = sphi 0, %s162
      %s163 = sphi 0, %s160
      %s164 = sphi 0, %s163
      %s180 = sphi 0, %s164
    $region4: #{tpu_custom_call.1} parent=1 // loop_header_branch
      %28 = sbr.rel (%p26) target = $region8
    $region5: #{tpu_custom_call.1} parent=1 // loop_body
      %s30 = ssub.s32 %s25, 1
      %s31 = ssub.s32 %s25, 2
      %s32 = sadd.s32 %s25, 1
      %s34 = sadd.s32 %s33, 1
      %p37 = scmp.eq.s32.totalorder %s25, 1
      %p38 = scmp.ne.s32.totalorder %s33, %s35
      %p39 = scmp.eq.s32.totalorder %s25, 0
      %p40 = por %p38, %p39
      %p41 = scmp.ne.s32.totalorder %s33, %s35
      %p42 = scmp.eq.s32.totalorder %s30, 1
      %p43 = por %p41, %p42
      %p44 = scmp.ne.s32.totalorder %s35, %s36
      %p45 = scmp.eq.s32.totalorder %s30, 0
      %p46 = por %p44, %p45
      %p47 = scmp.ne.s32.totalorder %s35, %s36
      %p48 = scmp.eq.s32.totalorder %s31, 1
      %p49 = por %p47, %p48
      %p51 = scmp.ne.s32.totalorder %s36, %s50
      %p52 = scmp.eq.s32.totalorder %s31, 0
      %p53 = por %p51, %p52
      %s54 = ssub.s32 %s25, %s32
      %p55 = scmp.eq.s32.totalorder %s54, 0
      %s57 = sadd.s32 %s56, 1
      %s58 = scalar_select %p55, %s56, %s57
      %p61 = pneg %p55
      %p62 = scmp.eq.s32.totalorder %s25, 1
      %p63 = por %p61, %p62
      %p64 = scmp.ne.s32.totalorder %s56, %s59
      %p65 = scmp.eq.s32.totalorder %s25, 0
      %p66 = por %p64, %p65
      %p67 = scmp.ne.s32.totalorder %s56, %s59
      %p68 = scmp.eq.s32.totalorder %s30, 1
      %p69 = por %p67, %p68
      %p70 = scmp.ne.s32.totalorder %s59, %s60
      %p71 = scmp.eq.s32.totalorder %s30, 0
      %p72 = por %p70, %p71
      %p73 = scmp.ne.s32.totalorder %s59, %s60
      %p74 = scmp.eq.s32.totalorder %s31, 1
      %p75 = por %p73, %p74
      %p77 = scmp.ne.s32.totalorder %s60, %s76
      %p78 = scmp.eq.s32.totalorder %s31, 0
      %p79 = por %p77, %p78
      %s80 = ssub.s32 %s25, %s32
      %p81 = scmp.eq.s32.totalorder %s80, 0
      %s83 = sadd.s32 %s82, 1
      %s84 = scalar_select %p81, %s82, %s83
      %p87 = pneg %p81
      %p88 = scmp.eq.s32.totalorder %s25, 1
      %p89 = por %p87, %p88
      %p90 = scmp.ne.s32.totalorder %s82, %s85
      %p91 = scmp.eq.s32.totalorder %s25, 0
      %p92 = por %p90, %p91
      %p93 = scmp.ne.s32.totalorder %s82, %s85
      %p94 = scmp.eq.s32.totalorder %s30, 1
      %p95 = por %p93, %p94
      %p96 = scmp.ne.s32.totalorder %s85, %s86
      %p97 = scmp.eq.s32.totalorder %s30, 0
      %p98 = por %p96, %p97
      %p99 = scmp.ne.s32.totalorder %s85, %s86
      %p100 = scmp.eq.s32.totalorder %s31, 1
      %p101 = por %p99, %p100
      %p103 = scmp.ne.s32.totalorder %s86, %s102
      %p104 = scmp.eq.s32.totalorder %s31, 0
      %p105 = por %p103, %p104
      %s106 = ssub.s32 %s25, %s32
      %p107 = scmp.eq.s32.totalorder %s106, 0
      %s109 = sadd.s32 %s108, 1
      %s110 = scalar_select %p107, %s108, %s109
      %p113 = pneg %p107
      %p114 = scmp.eq.s32.totalorder %s25, 1
      %p115 = por %p113, %p114
      %p116 = scmp.ne.s32.totalorder %s108, %s111
      %p117 = scmp.eq.s32.totalorder %s25, 0
      %p118 = por %p116, %p117
      %p119 = scmp.ne.s32.totalorder %s108, %s111
      %p120 = scmp.eq.s32.totalorder %s30, 1
      %p121 = por %p119, %p120
      %p122 = scmp.ne.s32.totalorder %s111, %s112
      %p123 = scmp.eq.s32.totalorder %s30, 0
      %p124 = por %p122, %p123
      %p125 = scmp.ne.s32.totalorder %s111, %s112
      %p126 = scmp.eq.s32.totalorder %s31, 1
      %p127 = por %p125, %p126
      %p129 = scmp.ne.s32.totalorder %s112, %s128
      %p130 = scmp.eq.s32.totalorder %s31, 0
      %p131 = por %p129, %p130
      %s132 = ssub.s32 %s25, %s32
      %p133 = scmp.eq.s32.totalorder %s132, 0
      %s135 = sadd.s32 %s134, 1
      %s136 = scalar_select %p133, %s134, %s135
      %p139 = pneg %p133
      %p140 = scmp.eq.s32.totalorder %s25, 1
      %p141 = por %p139, %p140
      %p142 = scmp.ne.s32.totalorder %s134, %s137
      %p143 = scmp.eq.s32.totalorder %s25, 0
      %p144 = por %p142, %p143
      %p145 = scmp.ne.s32.totalorder %s134, %s137
      %p146 = scmp.eq.s32.totalorder %s30, 1
      %p147 = por %p145, %p146
      %p148 = scmp.ne.s32.totalorder %s137, %s138
      %p149 = scmp.eq.s32.totalorder %s30, 0
      %p150 = por %p148, %p149
      %p151 = scmp.ne.s32.totalorder %s137, %s138
      %p152 = scmp.eq.s32.totalorder %s31, 1
      %p153 = por %p151, %p152
      %p155 = scmp.ne.s32.totalorder %s138, %s154
      %p156 = scmp.eq.s32.totalorder %s31, 0
      %p157 = por %p155, %p156
      %s158 = ssub.s32 %s25, %s32
      %p159 = scmp.eq.s32.totalorder %s158, 0
      %s161 = sadd.s32 %s160, 1
      %s162 = scalar_select %p159, %s160, %s161
      %p165 = pneg %p159
      %p166 = scmp.eq.s32.totalorder %s25, 1
      %p167 = por %p165, %p166
      %p168 = scmp.ne.s32.totalorder %s160, %s163
      %p169 = scmp.eq.s32.totalorder %s25, 0
      %p170 = por %p168, %p169
      %p171 = scmp.ne.s32.totalorder %s160, %s163
      %p172 = scmp.eq.s32.totalorder %s30, 1
      %p173 = por %p171, %p172
      %p174 = scmp.ne.s32.totalorder %s163, %s164
      %p175 = scmp.eq.s32.totalorder %s30, 0
      %p176 = por %p174, %p175
      %p177 = scmp.ne.s32.totalorder %s163, %s164
      %p178 = scmp.eq.s32.totalorder %s31, 1
      %p179 = por %p177, %p178
      %p181 = scmp.ne.s32.totalorder %s164, %s180
      %p182 = scmp.eq.s32.totalorder %s31, 0
      %p183 = por %p181, %p182
      %p184 = scmp.le.s32.totalorder 1, %s25
      %p185 = scmp.lt.s32.totalorder %s25, 3
      %p186 = pnand %p184, %p185
      %p187 = pneg %p186
      // Predicated region
      $region9: #{tpu_custom_call.1} parent=5 // pred_check
        _
      $region10: #{tpu_custom_call.1} parent=5 // pred_check_branch
        %189 = sbr.rel (%p186) target = $region12
      $region11: #{tpu_custom_call.1} parent=5 // pred_region
        %s190 = ssub.s32 %s25, 1
        // Predicated region
        $region13: #{tpu_custom_call.1} parent=11 // pred_check
          %p191 = pneg %p46
        $region14: #{tpu_custom_call.1} parent=11 // pred_check_branch
          %193 = sbr.rel (%p191) target = $region16
        $region15: #{tpu_custom_call.1} parent=11 // pred_region
          %s195 = ssub.s32 2048, 2048
          %196 = vsyncadd [#allocation3], %s195
          %s197 = sshll.u32 [#allocation2], 4
          %s198 = int_to_ptr.vmem [resolvable:$true] %s197
          %203 = dma.hbm_to_vmem [thread:$0]  %s0, 2048, %s198, [#allocation3], 64, 64, 4
        $region16: #{tpu_custom_call.1} parent=11 // pred_fallthru
          _
      $region12: #{tpu_custom_call.1} parent=5 // pred_fallthru
        _
      %p204 = scmp.lt.s32.totalorder %s25, 2
      // Predicated region
      $region17: #{tpu_custom_call.1} parent=5 // pred_check
        %p205 = pneg %p204
      $region18: #{tpu_custom_call.1} parent=5 // pred_check_branch
        %207 = sbr.rel (%p205) target = $region20
      $region19: #{tpu_custom_call.1} parent=5 // pred_region
        // Predicated region
        $region21: #{tpu_custom_call.1} parent=19 // pred_check
          %p208 = pneg %p66
        $region22: #{tpu_custom_call.1} parent=19 // pred_check_branch
          %210 = sbr.rel (%p208) target = $region24
        $region23: #{tpu_custom_call.1} parent=19 // pred_region
          %s211 = sand.u32 %s25, 1
          %s212 = scalar_lea.sflag [#allocation6], %s211
          %s213 = sand.u32 %s56, 1
          %s214 = smul.addr %s213, 256
          %s215 = scalar_lea.vmem [#allocation5], %s214
          %s216 = smul.u32 32, %s25
          %s218 = ssub.s32 4096, 4096
          %219 = vsyncadd %s212, %s218
          %s220 = smul.addr %s216, 2
          %s221 = smul.addr %s220, 64
          %s222 = scalar_lea.hbm %s1, %s221
          %s223 = sshll.u32 %s215, 4
          %s224 = int_to_ptr.vmem [resolvable:$true] %s223
          %229 = dma.hbm_to_vmem [thread:$0]  %s222, 4096, %s224, %s212, 128, 128, 8
        $region24: #{tpu_custom_call.1} parent=19 // pred_fallthru
          _
        // Predicated region
        $region25: #{tpu_custom_call.1} parent=19 // pred_check
          %p230 = pneg %p92
        $region26: #{tpu_custom_call.1} parent=19 // pred_check_branch
          %232 = sbr.rel (%p230) target = $region28
        $region27: #{tpu_custom_call.1} parent=19 // pred_region
          %s233 = sand.u32 %s25, 1
          %s234 = scalar_lea.sflag [#allocation6], %s233
          %s235 = sand.u32 %s82, 1
          %s236 = smul.addr %s235, 256
          %s237 = scalar_lea.vmem [#allocation7], %s236
          %s238 = smul.u32 32, %s25
          %s240 = ssub.s32 4096, 4096
          %241 = vsyncadd %s234, %s240
          %s242 = smul.addr %s238, 2
          %s243 = smul.addr %s242, 64
          %s244 = scalar_lea.hbm %s2, %s243
          %s245 = sshll.u32 %s237, 4
          %s246 = int_to_ptr.vmem [resolvable:$true] %s245
          %251 = dma.hbm_to_vmem [thread:$0]  %s244, 4096, %s246, %s234, 128, 128, 8
        $region28: #{tpu_custom_call.1} parent=19 // pred_fallthru
          _
        // Predicated region
        $region29: #{tpu_custom_call.1} parent=19 // pred_check
          %p252 = pneg %p118
        $region30: #{tpu_custom_call.1} parent=19 // pred_check_branch
          %254 = sbr.rel (%p252) target = $region32
        $region31: #{tpu_custom_call.1} parent=19 // pred_region
          %s255 = sand.u32 %s108, 1
          %s256 = scalar_lea.sflag [#allocation9], %s255
          %s257 = sand.u32 %s108, 1
          %s258 = smul.addr %s257, 128
          %s259 = scalar_lea.vmem [#allocation8], %s258
          %s260 = smul.u32 32, %s25
          %s262 = ssub.s32 2048, 2048
          %263 = vsyncadd %s256, %s262
          %s264 = smul.addr %s260, 64
          %s265 = scalar_lea.hbm %s3, %s264
          %s266 = sshll.u32 %s259, 4
          %s267 = int_to_ptr.vmem [resolvable:$true] %s266
          %272 = dma.hbm_to_vmem [thread:$0]  %s265, 2048, %s267, %s256, 64, 64, 4
        $region32: #{tpu_custom_call.1} parent=19 // pred_fallthru
          _
      $region20: #{tpu_custom_call.1} parent=5 // pred_fallthru
        _
      %p273 = scmp.le.s32.totalorder 1, %s25
      %p274 = scmp.lt.s32.totalorder %s25, 3
      %p275 = pnand %p273, %p274
      %p276 = pneg %p275
      // Predicated region
      $region33: #{tpu_custom_call.1} parent=5 // pred_check
        _
      $region34: #{tpu_custom_call.1} parent=5 // pred_check_branch
        %278 = sbr.rel (%p275) target = $region36
      $region35: #{tpu_custom_call.1} parent=5 // pred_region
        %s279 = ssub.s32 %s25, 1
        // Predicated region
        $region37: #{tpu_custom_call.1} parent=35 // pred_check
          %p280 = pneg %p46
        $region38: #{tpu_custom_call.1} parent=35 // pred_check_branch
          %282 = sbr.rel (%p280) target = $region40
        $region39: #{tpu_custom_call.1} parent=35 // pred_region
          %283 = dma.done [#allocation3], 2048
        $region40: #{tpu_custom_call.1} parent=35 // pred_fallthru
          _
        %s284 = sand.u32 %s30, 1
        %s285 = scalar_lea.sflag [#allocation6], %s284
        %s286 = sand.u32 %s59, 1
        %s287 = smul.addr %s286, 256
        %s288 = scalar_lea.vmem [#allocation5], %s287
        // Predicated region
        $region41: #{tpu_custom_call.1} parent=35 // pred_check
          %p289 = pneg %p72
        $region42: #{tpu_custom_call.1} parent=35 // pred_check_branch
          %291 = sbr.rel (%p289) target = $region44
        $region43: #{tpu_custom_call.1} parent=35 // pred_region
          %292 = dma.done %s285, 4096
        $region44: #{tpu_custom_call.1} parent=35 // pred_fallthru
          _
        %s293 = sand.u32 %s30, 1
        %s294 = scalar_lea.sflag [#allocation6], %s293
        %s295 = sand.u32 %s85, 1
        %s296 = smul.addr %s295, 256
        %s297 = scalar_lea.vmem [#allocation7], %s296
        // Predicated region
        $region45: #{tpu_custom_call.1} parent=35 // pred_check
          %p298 = pneg %p98
        $region46: #{tpu_custom_call.1} parent=35 // pred_check_branch
          %300 = sbr.rel (%p298) target = $region48
        $region47: #{tpu_custom_call.1} parent=35 // pred_region
          %301 = dma.done %s294, 4096
        $region48: #{tpu_custom_call.1} parent=35 // pred_fallthru
          _
        %s302 = sand.u32 %s111, 1
        %s303 = scalar_lea.sflag [#allocation9], %s302
        %s304 = sand.u32 %s111, 1
        %s305 = smul.addr %s304, 128
        %s306 = scalar_lea.vmem [#allocation8], %s305
        // Predicated region
        $region49: #{tpu_custom_call.1} parent=35 // pred_check
          %p307 = pneg %p124
        $region50: #{tpu_custom_call.1} parent=35 // pred_check_branch
          %309 = sbr.rel (%p307) target = $region52
        $region51: #{tpu_custom_call.1} parent=35 // pred_region
          %310 = dma.done %s303, 2048
        $region52: #{tpu_custom_call.1} parent=35 // pred_fallthru
          _
        %p311 = pneg %p46
        %p312 = pneg %p43
        %s313 = sand.u32 %s30, 1
        %s314 = scalar_lea.sflag [#allocation6], %s313
        %s315 = sand.u32 %s59, 1
        %s316 = smul.addr %s315, 256
        %s317 = scalar_lea.vmem [#allocation5], %s316
        %p318 = pneg %p72
        %p319 = pneg %p69
        %s320 = sand.u32 %s30, 1
        %s321 = scalar_lea.sflag [#allocation6], %s320
        %s322 = sand.u32 %s85, 1
        %s323 = smul.addr %s322, 256
        %s324 = scalar_lea.vmem [#allocation7], %s323
        %p325 = pneg %p98
        %p326 = pneg %p95
        %s327 = sand.u32 %s111, 1
        %s328 = scalar_lea.sflag [#allocation9], %s327
        %s329 = sand.u32 %s111, 1
        %s330 = smul.addr %s329, 128
        %s331 = scalar_lea.vmem [#allocation8], %s330
        %p332 = pneg %p124
        %p333 = pneg %p121
        %p334 = pneg %p150
        %p335 = pneg %p147
        %s336 = sand.u32 %s137, 1
        %s337 = scalar_lea.sflag [#allocation4], %s336
        %s338 = sand.u32 %s137, 1
        %s339 = smul.addr %s338, 128
        %s340 = scalar_lea.vmem [#allocation10], %s339
        %p341 = pneg %p176
        %p342 = pneg %p173
        %s343 = sand.u32 %s163, 1
        %s344 = scalar_lea.sflag [#allocation12], %s343
        %s345 = sand.u32 %s163, 1
        %s346 = smul.addr %s345, 128
        %s347 = scalar_lea.vmem [#allocation11], %s346
        %s348 = smul.u32 32, %s30
        %s349 = smul.u32 32, %s30
        %s350 = smul.u32 32, %s30
        %s351 = smul.u32 32, %s30
        %s352 = smul.u32 32, %s30
        %v354 = vld [vmem:[#allocation2] sm:$0xf]
        %v355 = vld [vmem:[#allocation2 + $0x4] sm:$0xf]
        %v356 = vld [vmem:[#allocation2 + $0x8] sm:$0xf]
        %v357 = vld [vmem:[#allocation2 + $0xc] sm:$0xf]
        %v358 = vld [vmem:[#allocation2 + $0x10] sm:$0xf]
        %v359 = vld [vmem:[#allocation2 + $0x14] sm:$0xf]
        %v360 = vld [vmem:[#allocation2 + $0x18] sm:$0xf]
        %v361 = vld [vmem:[#allocation2 + $0x1c] sm:$0xf]
        %v362 = vld [vmem:[#allocation2 + $0x20] sm:$0xf]
        %v363 = vld [vmem:[#allocation2 + $0x24] sm:$0xf]
        %v364 = vld [vmem:[#allocation2 + $0x28] sm:$0xf]
        %v365 = vld [vmem:[#allocation2 + $0x2c] sm:$0xf]
        %v366 = vld [vmem:[#allocation2 + $0x30] sm:$0xf]
        %v367 = vld [vmem:[#allocation2 + $0x34] sm:$0xf]
        %v368 = vld [vmem:[#allocation2 + $0x38] sm:$0xf]
        %v369 = vld [vmem:[#allocation2 + $0x3c] sm:$0xf]
        %v370 = vld [vmem:[#allocation2 + $0x40] sm:$0xf]
        %v371 = vld [vmem:[#allocation2 + $0x44] sm:$0xf]
        %v372 = vld [vmem:[#allocation2 + $0x48] sm:$0xf]
        %v373 = vld [vmem:[#allocation2 + $0x4c] sm:$0xf]
        %v374 = vld [vmem:[#allocation2 + $0x50] sm:$0xf]
        %v375 = vld [vmem:[#allocation2 + $0x54] sm:$0xf]
        %v376 = vld [vmem:[#allocation2 + $0x58] sm:$0xf]
        %v377 = vld [vmem:[#allocation2 + $0x5c] sm:$0xf]
        %v378 = vld [vmem:[#allocation2 + $0x60] sm:$0xf]
        %v379 = vld [vmem:[#allocation2 + $0x64] sm:$0xf]
        %v380 = vld [vmem:[#allocation2 + $0x68] sm:$0xf]
        %v381 = vld [vmem:[#allocation2 + $0x6c] sm:$0xf]
        %v382 = vld [vmem:[#allocation2 + $0x70] sm:$0xf]
        %v383 = vld [vmem:[#allocation2 + $0x74] sm:$0xf]
        %v384 = vld [vmem:[#allocation2 + $0x78] sm:$0xf]
        %v385 = vld [vmem:[#allocation2 + $0x7c] sm:$0xf]
        %v386 = vld [vmem:[%s306] sm:$0xf]
        %v387 = vld [vmem:[%s306 + $0x4] sm:$0xf]
        %v388 = vld [vmem:[%s306 + $0x8] sm:$0xf]
        %v389 = vld [vmem:[%s306 + $0xc] sm:$0xf]
        %v390 = vld [vmem:[%s306 + $0x10] sm:$0xf]
        %v391 = vld [vmem:[%s306 + $0x14] sm:$0xf]
        %v392 = vld [vmem:[%s306 + $0x18] sm:$0xf]
        %v393 = vld [vmem:[%s306 + $0x1c] sm:$0xf]
        %v394 = vld [vmem:[%s306 + $0x20] sm:$0xf]
        %v395 = vld [vmem:[%s306 + $0x24] sm:$0xf]
        %v396 = vld [vmem:[%s306 + $0x28] sm:$0xf]
        %v397 = vld [vmem:[%s306 + $0x2c] sm:$0xf]
        %v398 = vld [vmem:[%s306 + $0x30] sm:$0xf]
        %v399 = vld [vmem:[%s306 + $0x34] sm:$0xf]
        %v400 = vld [vmem:[%s306 + $0x38] sm:$0xf]
        %v401 = vld [vmem:[%s306 + $0x3c] sm:$0xf]
        %v402 = vld [vmem:[%s306 + $0x40] sm:$0xf]
        %v403 = vld [vmem:[%s306 + $0x44] sm:$0xf]
        %v404 = vld [vmem:[%s306 + $0x48] sm:$0xf]
        %v405 = vld [vmem:[%s306 + $0x4c] sm:$0xf]
        %v406 = vld [vmem:[%s306 + $0x50] sm:$0xf]
        %v407 = vld [vmem:[%s306 + $0x54] sm:$0xf]
        %v408 = vld [vmem:[%s306 + $0x58] sm:$0xf]
        %v409 = vld [vmem:[%s306 + $0x5c] sm:$0xf]
        %v410 = vld [vmem:[%s306 + $0x60] sm:$0xf]
        %v411 = vld [vmem:[%s306 + $0x64] sm:$0xf]
        %v412 = vld [vmem:[%s306 + $0x68] sm:$0xf]
        %v413 = vld [vmem:[%s306 + $0x6c] sm:$0xf]
        %v414 = vld [vmem:[%s306 + $0x70] sm:$0xf]
        %v415 = vld [vmem:[%s306 + $0x74] sm:$0xf]
        %v416 = vld [vmem:[%s306 + $0x78] sm:$0xf]
        %v417 = vld [vmem:[%s306 + $0x7c] sm:$0xf]
        %v418 = vunpack.c.l.bf16 %v386
        %v419 = vunpack.c.l.bf16 %v387
        %v420 = vunpack.c.l.bf16 %v388
        %v421 = vunpack.c.l.bf16 %v389
        %v422 = vunpack.c.l.bf16 %v390
        %v423 = vunpack.c.l.bf16 %v391
        %v424 = vunpack.c.l.bf16 %v392
        %v425 = vunpack.c.l.bf16 %v393
        %v426 = vunpack.c.l.bf16 %v394
        %v427 = vunpack.c.l.bf16 %v395
        %v428 = vunpack.c.l.bf16 %v396
        %v429 = vunpack.c.l.bf16 %v397
        %v430 = vunpack.c.l.bf16 %v398
        %v431 = vunpack.c.l.bf16 %v399
        %v432 = vunpack.c.l.bf16 %v400
        %v433 = vunpack.c.l.bf16 %v401
        %v434 = vunpack.c.l.bf16 %v402
        %v435 = vunpack.c.l.bf16 %v403
        %v436 = vunpack.c.l.bf16 %v404
        %v437 = vunpack.c.l.bf16 %v405
        %v438 = vunpack.c.l.bf16 %v406
        %v439 = vunpack.c.l.bf16 %v407
        %v440 = vunpack.c.l.bf16 %v408
        %v441 = vunpack.c.l.bf16 %v409
        %v442 = vunpack.c.l.bf16 %v410
        %v443 = vunpack.c.l.bf16 %v411
        %v444 = vunpack.c.l.bf16 %v412
        %v445 = vunpack.c.l.bf16 %v413
        %v446 = vunpack.c.l.bf16 %v414
        %v447 = vunpack.c.l.bf16 %v415
        %v448 = vunpack.c.l.bf16 %v416
        %v449 = vunpack.c.l.bf16 %v417
        %v450 = vld [vmem:[%s288] sm:$0xff]
        %v451 = vld [vmem:[%s288 + $0x8] sm:$0xff]
        %v452 = vld [vmem:[%s288 + $0x10] sm:$0xff]
        %v453 = vld [vmem:[%s288 + $0x18] sm:$0xff]
        %v454 = vld [vmem:[%s288 + $0x20] sm:$0xff]
        %v455 = vld [vmem:[%s288 + $0x28] sm:$0xff]
        %v456 = vld [vmem:[%s288 + $0x30] sm:$0xff]
        %v457 = vld [vmem:[%s288 + $0x38] sm:$0xff]
        %v458 = vld [vmem:[%s288 + $0x40] sm:$0xff]
        %v459 = vld [vmem:[%s288 + $0x48] sm:$0xff]
        %v460 = vld [vmem:[%s288 + $0x50] sm:$0xff]
        %v461 = vld [vmem:[%s288 + $0x58] sm:$0xff]
        %v462 = vld [vmem:[%s288 + $0x60] sm:$0xff]
        %v463 = vld [vmem:[%s288 + $0x68] sm:$0xff]
        %v464 = vld [vmem:[%s288 + $0x70] sm:$0xff]
        %v465 = vld [vmem:[%s288 + $0x78] sm:$0xff]
        %v466 = vld [vmem:[%s288 + $0x80] sm:$0xff]
        %v467 = vld [vmem:[%s288 + $0x88] sm:$0xff]
        %v468 = vld [vmem:[%s288 + $0x90] sm:$0xff]
        %v469 = vld [vmem:[%s288 + $0x98] sm:$0xff]
        %v470 = vld [vmem:[%s288 + $0xa0] sm:$0xff]
        %v471 = vld [vmem:[%s288 + $0xa8] sm:$0xff]
        %v472 = vld [vmem:[%s288 + $0xb0] sm:$0xff]
        %v473 = vld [vmem:[%s288 + $0xb8] sm:$0xff]
        %v474 = vld [vmem:[%s288 + $0xc0] sm:$0xff]
        %v475 = vld [vmem:[%s288 + $0xc8] sm:$0xff]
        %v476 = vld [vmem:[%s288 + $0xd0] sm:$0xff]
        %v477 = vld [vmem:[%s288 + $0xd8] sm:$0xff]
        %v478 = vld [vmem:[%s288 + $0xe0] sm:$0xff]
        %v479 = vld [vmem:[%s288 + $0xe8] sm:$0xff]
        %v480 = vld [vmem:[%s288 + $0xf0] sm:$0xff]
        %v481 = vld [vmem:[%s288 + $0xf8] sm:$0xff]
        %v482 = vld [vmem:[%s297] sm:$0xff]
        %v483 = vld [vmem:[%s297 + $0x8] sm:$0xff]
        %v484 = vld [vmem:[%s297 + $0x10] sm:$0xff]
        %v485 = vld [vmem:[%s297 + $0x18] sm:$0xff]
        %v486 = vld [vmem:[%s297 + $0x20] sm:$0xff]
        %v487 = vld [vmem:[%s297 + $0x28] sm:$0xff]
        %v488 = vld [vmem:[%s297 + $0x30] sm:$0xff]
        %v489 = vld [vmem:[%s297 + $0x38] sm:$0xff]
        %v490 = vld [vmem:[%s297 + $0x40] sm:$0xff]
        %v491 = vld [vmem:[%s297 + $0x48] sm:$0xff]
        %v492 = vld [vmem:[%s297 + $0x50] sm:$0xff]
        %v493 = vld [vmem:[%s297 + $0x58] sm:$0xff]
        %v494 = vld [vmem:[%s297 + $0x60] sm:$0xff]
        %v495 = vld [vmem:[%s297 + $0x68] sm:$0xff]
        %v496 = vld [vmem:[%s297 + $0x70] sm:$0xff]
        %v497 = vld [vmem:[%s297 + $0x78] sm:$0xff]
        %v498 = vld [vmem:[%s297 + $0x80] sm:$0xff]
        %v499 = vld [vmem:[%s297 + $0x88] sm:$0xff]
        %v500 = vld [vmem:[%s297 + $0x90] sm:$0xff]
        %v501 = vld [vmem:[%s297 + $0x98] sm:$0xff]
        %v502 = vld [vmem:[%s297 + $0xa0] sm:$0xff]
        %v503 = vld [vmem:[%s297 + $0xa8] sm:$0xff]
        %v504 = vld [vmem:[%s297 + $0xb0] sm:$0xff]
        %v505 = vld [vmem:[%s297 + $0xb8] sm:$0xff]
        %v506 = vld [vmem:[%s297 + $0xc0] sm:$0xff]
        %v507 = vld [vmem:[%s297 + $0xc8] sm:$0xff]
        %v508 = vld [vmem:[%s297 + $0xd0] sm:$0xff]
        %v509 = vld [vmem:[%s297 + $0xd8] sm:$0xff]
        %v510 = vld [vmem:[%s297 + $0xe0] sm:$0xff]
        %v511 = vld [vmem:[%s297 + $0xe8] sm:$0xff]
        %v512 = vld [vmem:[%s297 + $0xf0] sm:$0xff]
        %v513 = vld [vmem:[%s297 + $0xf8] sm:$0xff]
        %v546 = vunpack.c.l.b16 %v450
        %v547 = vunpack.c.h.b16 %v450
        %v548 = vunpack.c.l.b16 %v451
        %v549 = vunpack.c.h.b16 %v451
        %v550 = vunpack.c.l.b16 %v452
        %v551 = vunpack.c.h.b16 %v452
        %v552 = vunpack.c.l.b16 %v453
        %v553 = vunpack.c.h.b16 %v453
        %v554 = vunpack.c.l.b16 %v454
        %v555 = vunpack.c.h.b16 %v454
        %v556 = vunpack.c.l.b16 %v455
        %v557 = vunpack.c.h.b16 %v455
        %v558 = vunpack.c.l.b16 %v456
        %v559 = vunpack.c.h.b16 %v456
        %v560 = vunpack.c.l.b16 %v457
        %v561 = vunpack.c.h.b16 %v457
        %v562 = vunpack.c.l.b16 %v458
        %v563 = vunpack.c.h.b16 %v458
        %v564 = vunpack.c.l.b16 %v459
        %v565 = vunpack.c.h.b16 %v459
        %v566 = vunpack.c.l.b16 %v460
        %v567 = vunpack.c.h.b16 %v460
        %v568 = vunpack.c.l.b16 %v461
        %v569 = vunpack.c.h.b16 %v461
        %v570 = vunpack.c.l.b16 %v462
        %v571 = vunpack.c.h.b16 %v462
        %v572 = vunpack.c.l.b16 %v463
        %v573 = vunpack.c.h.b16 %v463
        %v574 = vunpack.c.l.b16 %v464
        %v575 = vunpack.c.h.b16 %v464
        %v576 = vunpack.c.l.b16 %v465
        %v577 = vunpack.c.h.b16 %v465
        %v578 = vunpack.c.l.b16 %v466
        %v579 = vunpack.c.h.b16 %v466
        %v580 = vunpack.c.l.b16 %v467
        %v581 = vunpack.c.h.b16 %v467
        %v582 = vunpack.c.l.b16 %v468
        %v583 = vunpack.c.h.b16 %v468
        %v584 = vunpack.c.l.b16 %v469
        %v585 = vunpack.c.h.b16 %v469
        %v586 = vunpack.c.l.b16 %v470
        %v587 = vunpack.c.h.b16 %v470
        %v588 = vunpack.c.l.b16 %v471
        %v589 = vunpack.c.h.b16 %v471
        %v590 = vunpack.c.l.b16 %v472
        %v591 = vunpack.c.h.b16 %v472
        %v592 = vunpack.c.l.b16 %v473
        %v593 = vunpack.c.h.b16 %v473
        %v594 = vunpack.c.l.b16 %v474
        %v595 = vunpack.c.h.b16 %v474
        %v596 = vunpack.c.l.b16 %v475
        %v597 = vunpack.c.h.b16 %v475
        %v598 = vunpack.c.l.b16 %v476
        %v599 = vunpack.c.h.b16 %v476
        %v600 = vunpack.c.l.b16 %v477
        %v601 = vunpack.c.h.b16 %v477
        %v602 = vunpack.c.l.b16 %v478
        %v603 = vunpack.c.h.b16 %v478
        %v604 = vunpack.c.l.b16 %v479
        %v605 = vunpack.c.h.b16 %v479
        %v606 = vunpack.c.l.b16 %v480
        %v607 = vunpack.c.h.b16 %v480
        %v608 = vunpack.c.l.b16 %v481
        %v609 = vunpack.c.h.b16 %v481
        %v610 = vpack.c.b16 %v548, %v546
        %v611 = vpack.c.b16 %v549, %v547
        %v612 = vpack.c.b16 %v552, %v550
        %v613 = vpack.c.b16 %v553, %v551
        %v614 = vpack.c.b16 %v556, %v554
        %v615 = vpack.c.b16 %v557, %v555
        %v616 = vpack.c.b16 %v560, %v558
        %v617 = vpack.c.b16 %v561, %v559
        %v618 = vpack.c.b16 %v564, %v562
        %v619 = vpack.c.b16 %v565, %v563
        %v620 = vpack.c.b16 %v568, %v566
        %v621 = vpack.c.b16 %v569, %v567
        %v622 = vpack.c.b16 %v572, %v570
        %v623 = vpack.c.b16 %v573, %v571
        %v624 = vpack.c.b16 %v576, %v574
        %v625 = vpack.c.b16 %v577, %v575
        %v626 = vpack.c.b16 %v580, %v578
        %v627 = vpack.c.b16 %v581, %v579
        %v628 = vpack.c.b16 %v584, %v582
        %v629 = vpack.c.b16 %v585, %v583
        %v630 = vpack.c.b16 %v588, %v586
        %v631 = vpack.c.b16 %v589, %v587
        %v632 = vpack.c.b16 %v592, %v590
        %v633 = vpack.c.b16 %v593, %v591
        %v634 = vpack.c.b16 %v596, %v594
        %v635 = vpack.c.b16 %v597, %v595
        %v636 = vpack.c.b16 %v600, %v598
        %v637 = vpack.c.b16 %v601, %v599
        %v638 = vpack.c.b16 %v604, %v602
        %v639 = vpack.c.b16 %v605, %v603
        %v640 = vpack.c.b16 %v608, %v606
        %v641 = vpack.c.b16 %v609, %v607
        %v706 = vunpack.c.l.b16 %v354
        %v707 = vunpack.c.l.b16 %v355
        %v708 = vunpack.c.l.b16 %v356
        %v709 = vunpack.c.l.b16 %v357
        %v710 = vunpack.c.l.b16 %v358
        %v711 = vunpack.c.l.b16 %v359
        %v712 = vunpack.c.l.b16 %v360
        %v713 = vunpack.c.l.b16 %v361
        %v714 = vunpack.c.l.b16 %v362
        %v715 = vunpack.c.l.b16 %v363
        %v716 = vunpack.c.l.b16 %v364
        %v717 = vunpack.c.l.b16 %v365
        %v718 = vunpack.c.l.b16 %v366
        %v719 = vunpack.c.l.b16 %v367
        %v720 = vunpack.c.l.b16 %v368
        %v721 = vunpack.c.l.b16 %v369
        %v722 = vunpack.c.l.b16 %v370
        %v723 = vunpack.c.l.b16 %v371
        %v724 = vunpack.c.l.b16 %v372
        %v725 = vunpack.c.l.b16 %v373
        %v726 = vunpack.c.l.b16 %v374
        %v727 = vunpack.c.l.b16 %v375
        %v728 = vunpack.c.l.b16 %v376
        %v729 = vunpack.c.l.b16 %v377
        %v730 = vunpack.c.l.b16 %v378
        %v731 = vunpack.c.l.b16 %v379
        %v732 = vunpack.c.l.b16 %v380
        %v733 = vunpack.c.l.b16 %v381
        %v734 = vunpack.c.l.b16 %v382
        %v735 = vunpack.c.l.b16 %v383
        %v736 = vunpack.c.l.b16 %v384
        %v737 = vunpack.c.l.b16 %v385
        %v738 = vpack.c.b16 %v707, %v706
        %v739 = vpack.c.b16 %v709, %v708
        %v740 = vpack.c.b16 %v711, %v710
        %v741 = vpack.c.b16 %v713, %v712
        %v742 = vpack.c.b16 %v715, %v714
        %v743 = vpack.c.b16 %v717, %v716
        %v744 = vpack.c.b16 %v719, %v718
        %v745 = vpack.c.b16 %v721, %v720
        %v746 = vpack.c.b16 %v723, %v722
        %v747 = vpack.c.b16 %v725, %v724
        %v748 = vpack.c.b16 %v727, %v726
        %v749 = vpack.c.b16 %v729, %v728
        %v750 = vpack.c.b16 %v731, %v730
        %v751 = vpack.c.b16 %v733, %v732
        %v752 = vpack.c.b16 %v735, %v734
        %v753 = vpack.c.b16 %v737, %v736
        %770 = vmatprep.subr.bf16.mxu0 0
        %771 = vmatpush1.bf16.msra.mxu0 %v745
        %772 = vmatprep.subr.bf16.mxu0 0
        %773 = vmatpush1.bf16.msra.mxu0 %v744
        %774 = vmatprep.subr.bf16.mxu0 0
        %775 = vmatpush1.bf16.msra.mxu0 %v743
        %776 = vmatprep.subr.bf16.mxu0 0
        %777 = vmatpush1.bf16.msra.mxu0 %v742
        %778 = vmatprep.subr.bf16.mxu0 0
        %779 = vmatpush1.bf16.msra.mxu0 %v741
        %780 = vmatprep.subr.bf16.mxu0 0
        %781 = vmatpush1.bf16.msra.mxu0 %v740
        %782 = vmatprep.subr.bf16.mxu0 0
        %783 = vmatpush1.bf16.msra.mxu0 %v739
        %784 = vmatprep.subr.bf16.mxu0 0
        %785 = vmatpush1.bf16.msra.mxu0 %v738
        %786 = vmatprep.subr.bf16.mxu0 0
        %787 = vmatpush2.bf16.msra.mxu0 %v753
        %788 = vmatprep.subr.bf16.mxu0 0
        %789 = vmatpush2.bf16.msra.mxu0 %v752
        %790 = vmatprep.subr.bf16.mxu0 0
        %791 = vmatpush2.bf16.msra.mxu0 %v751
        %792 = vmatprep.subr.bf16.mxu0 0
        %793 = vmatpush2.bf16.msra.mxu0 %v750
        %794 = vmatprep.subr.bf16.mxu0 0
        %795 = vmatpush2.bf16.msra.mxu0 %v749
        %796 = vmatprep.subr.bf16.mxu0 0
        %797 = vmatpush2.bf16.msra.mxu0 %v748
        %798 = vmatprep.subr.bf16.mxu0 0
        %799 = vmatpush2.bf16.msra.mxu0 %v747
        %800 = vmatprep.subr.bf16.mxu0 0
        %801 = vmatpush2.bf16.msra.mxu0 %v746
        %802 = vmatprep.mubr.bf16.mxu0 %v611
        %803 = vmatmul.mubr.bf16.gmra.mxu0 %v610
        %v804 = vpop.f32.mrf.mxu0
        %v805 = vadd.f32 %v418, %v804
        %v806 = vpop.f32.mrf.mxu0
        %v807 = vpop.f32.mrf.mxu0
        %v808 = vadd.f32 %v419, %v807
        %v809 = vpop.f32.mrf.mxu0
        %810 = vmatprep.mubr.bf16.mxu0 %v613
        %811 = vmatmul.mubr.bf16.gmra.mxu0 %v612
        %v812 = vpop.f32.mrf.mxu0
        %v813 = vadd.f32 %v420, %v812
        %v814 = vpop.f32.mrf.mxu0
        %v815 = vpop.f32.mrf.mxu0
        %v816 = vadd.f32 %v421, %v815
        %v817 = vpop.f32.mrf.mxu0
        %818 = vmatprep.mubr.bf16.mxu0 %v615
        %819 = vmatmul.mubr.bf16.gmra.mxu0 %v614
        %v820 = vpop.f32.mrf.mxu0
        %v821 = vadd.f32 %v422, %v820
        %v822 = vpop.f32.mrf.mxu0
        %v823 = vpop.f32.mrf.mxu0
        %v824 = vadd.f32 %v423, %v823
        %v825 = vpop.f32.mrf.mxu0
        %826 = vmatprep.mubr.bf16.mxu0 %v617
        %827 = vmatmul.mubr.bf16.gmra.mxu0 %v616
        %v828 = vpop.f32.mrf.mxu0
        %v829 = vadd.f32 %v424, %v828
        %v830 = vpop.f32.mrf.mxu0
        %v831 = vpop.f32.mrf.mxu0
        %v832 = vadd.f32 %v425, %v831
        %v833 = vpop.f32.mrf.mxu0
        %834 = vmatprep.mubr.bf16.mxu0 %v619
        %835 = vmatmul.mubr.bf16.gmra.mxu0 %v618
        %v836 = vpop.f32.mrf.mxu0
        %v837 = vadd.f32 %v426, %v836
        %v838 = vpop.f32.mrf.mxu0
        %v839 = vpop.f32.mrf.mxu0
        %v840 = vadd.f32 %v427, %v839
        %v841 = vpop.f32.mrf.mxu0
        %842 = vmatprep.mubr.bf16.mxu0 %v621
        %843 = vmatmul.mubr.bf16.gmra.mxu0 %v620
        %v844 = vpop.f32.mrf.mxu0
        %v845 = vadd.f32 %v428, %v844
        %v846 = vpop.f32.mrf.mxu0
        %v847 = vpop.f32.mrf.mxu0
        %v848 = vadd.f32 %v429, %v847
        %v849 = vpop.f32.mrf.mxu0
        %850 = vmatprep.mubr.bf16.mxu0 %v623
        %851 = vmatmul.mubr.bf16.gmra.mxu0 %v622
        %v852 = vpop.f32.mrf.mxu0
        %v853 = vadd.f32 %v430, %v852
        %v854 = vpop.f32.mrf.mxu0
        %v855 = vpop.f32.mrf.mxu0
        %v856 = vadd.f32 %v431, %v855
        %v857 = vpop.f32.mrf.mxu0
        %858 = vmatprep.mubr.bf16.mxu0 %v625
        %859 = vmatmul.mubr.bf16.gmra.mxu0 %v624
        %v860 = vpop.f32.mrf.mxu0
        %v861 = vadd.f32 %v432, %v860
        %v862 = vpop.f32.mrf.mxu0
        %v863 = vpop.f32.mrf.mxu0
        %v864 = vadd.f32 %v433, %v863
        %v865 = vpop.f32.mrf.mxu0
        %866 = vmatprep.mubr.bf16.mxu0 %v627
        %867 = vmatmul.mubr.bf16.gmra.mxu0 %v626
        %v868 = vpop.f32.mrf.mxu0
        %v869 = vadd.f32 %v434, %v868
        %v870 = vpop.f32.mrf.mxu0
        %v871 = vpop.f32.mrf.mxu0
        %v872 = vadd.f32 %v435, %v871
        %v873 = vpop.f32.mrf.mxu0
        %874 = vmatprep.mubr.bf16.mxu0 %v629
        %875 = vmatmul.mubr.bf16.gmra.mxu0 %v628
        %v876 = vpop.f32.mrf.mxu0
        %v877 = vadd.f32 %v436, %v876
        %v878 = vpop.f32.mrf.mxu0
        %v879 = vpop.f32.mrf.mxu0
        %v880 = vadd.f32 %v437, %v879
        %v881 = vpop.f32.mrf.mxu0
        %882 = vmatprep.mubr.bf16.mxu0 %v631
        %883 = vmatmul.mubr.bf16.gmra.mxu0 %v630
        %v884 = vpop.f32.mrf.mxu0
        %v885 = vadd.f32 %v438, %v884
        %v886 = vpop.f32.mrf.mxu0
        %v887 = vpop.f32.mrf.mxu0
        %v888 = vadd.f32 %v439, %v887
        %v889 = vpop.f32.mrf.mxu0
        %890 = vmatprep.mubr.bf16.mxu0 %v633
        %891 = vmatmul.mubr.bf16.gmra.mxu0 %v632
        %v892 = vpop.f32.mrf.mxu0
        %v893 = vadd.f32 %v440, %v892
        %v894 = vpop.f32.mrf.mxu0
        %v895 = vpop.f32.mrf.mxu0
        %v896 = vadd.f32 %v441, %v895
        %v897 = vpop.f32.mrf.mxu0
        %898 = vmatprep.mubr.bf16.mxu0 %v635
        %899 = vmatmul.mubr.bf16.gmra.mxu0 %v634
        %v900 = vpop.f32.mrf.mxu0
        %v901 = vadd.f32 %v442, %v900
        %v902 = vpop.f32.mrf.mxu0
        %v903 = vpop.f32.mrf.mxu0
        %v904 = vadd.f32 %v443, %v903
        %v905 = vpop.f32.mrf.mxu0
        %906 = vmatprep.mubr.bf16.mxu0 %v637
        %907 = vmatmul.mubr.bf16.gmra.mxu0 %v636
        %v908 = vpop.f32.mrf.mxu0
        %v909 = vadd.f32 %v444, %v908
        %v910 = vpop.f32.mrf.mxu0
        %v911 = vpop.f32.mrf.mxu0
        %v912 = vadd.f32 %v445, %v911
        %v913 = vpop.f32.mrf.mxu0
        %914 = vmatprep.mubr.bf16.mxu0 %v639
        %915 = vmatmul.mubr.bf16.gmra.mxu0 %v638
        %v916 = vpop.f32.mrf.mxu0
        %v917 = vadd.f32 %v446, %v916
        %v918 = vpop.f32.mrf.mxu0
        %v919 = vpop.f32.mrf.mxu0
        %v920 = vadd.f32 %v447, %v919
        %v921 = vpop.f32.mrf.mxu0
        %922 = vmatprep.mubr.bf16.mxu0 %v641
        %923 = vmatmul.mubr.bf16.gmra.mxu0 %v640
        %v924 = vpop.f32.mrf.mxu0
        %v925 = vadd.f32 %v448, %v924
        %v926 = vpop.f32.mrf.mxu0
        %v927 = vpop.f32.mrf.mxu0
        %v928 = vadd.f32 %v449, %v927
        %v929 = vpop.f32.mrf.mxu0
        %930 = vdwg.mxu0
        %v931 = vmax.f32 %v805, 0.0
        %v932 = vmax.f32 %v808, 0.0
        %v933 = vmax.f32 %v813, 0.0
        %v934 = vmax.f32 %v816, 0.0
        %v935 = vmax.f32 %v821, 0.0
        %v936 = vmax.f32 %v824, 0.0
        %v937 = vmax.f32 %v829, 0.0
        %v938 = vmax.f32 %v832, 0.0
        %v939 = vmax.f32 %v837, 0.0
        %v940 = vmax.f32 %v840, 0.0
        %v941 = vmax.f32 %v845, 0.0
        %v942 = vmax.f32 %v848, 0.0
        %v943 = vmax.f32 %v853, 0.0
        %v944 = vmax.f32 %v856, 0.0
        %v945 = vmax.f32 %v861, 0.0
        %v946 = vmax.f32 %v864, 0.0
        %v947 = vmax.f32 %v869, 0.0
        %v948 = vmax.f32 %v872, 0.0
        %v949 = vmax.f32 %v877, 0.0
        %v950 = vmax.f32 %v880, 0.0
        %v951 = vmax.f32 %v885, 0.0
        %v952 = vmax.f32 %v888, 0.0
        %v953 = vmax.f32 %v893, 0.0
        %v954 = vmax.f32 %v896, 0.0
        %v955 = vmax.f32 %v901, 0.0
        %v956 = vmax.f32 %v904, 0.0
        %v957 = vmax.f32 %v909, 0.0
        %v958 = vmax.f32 %v912, 0.0
        %v959 = vmax.f32 %v917, 0.0
        %v960 = vmax.f32 %v920, 0.0
        %v961 = vmax.f32 %v925, 0.0
        %v962 = vmax.f32 %v928, 0.0
        %v963 = vpack.c.bf16 %v932, %v931
        %v964 = vpack.c.bf16 %v934, %v933
        %v965 = vpack.c.bf16 %v936, %v935
        %v966 = vpack.c.bf16 %v938, %v937
        %v967 = vpack.c.bf16 %v940, %v939
        %v968 = vpack.c.bf16 %v942, %v941
        %v969 = vpack.c.bf16 %v944, %v943
        %v970 = vpack.c.bf16 %v946, %v945
        %v971 = vpack.c.bf16 %v948, %v947
        %v972 = vpack.c.bf16 %v950, %v949
        %v973 = vpack.c.bf16 %v952, %v951
        %v974 = vpack.c.bf16 %v954, %v953
        %v975 = vpack.c.bf16 %v956, %v955
        %v976 = vpack.c.bf16 %v958, %v957
        %v977 = vpack.c.bf16 %v960, %v959
        %v978 = vpack.c.bf16 %v962, %v961
        %v995 = vunpack.c.l.b16 %v963
        %v996 = vunpack.c.h.b16 %v963
        %v997 = vunpack.c.l.b16 %v964
        %v998 = vunpack.c.h.b16 %v964
        %v999 = vunpack.c.l.b16 %v965
        %v1000 = vunpack.c.h.b16 %v965
        %v1001 = vunpack.c.l.b16 %v966
        %v1002 = vunpack.c.h.b16 %v966
        %v1003 = vunpack.c.l.b16 %v967
        %v1004 = vunpack.c.h.b16 %v967
        %v1005 = vunpack.c.l.b16 %v968
        %v1006 = vunpack.c.h.b16 %v968
        %v1007 = vunpack.c.l.b16 %v969
        %v1008 = vunpack.c.h.b16 %v969
        %v1009 = vunpack.c.l.b16 %v970
        %v1010 = vunpack.c.h.b16 %v970
        %v1011 = vunpack.c.l.b16 %v971
        %v1012 = vunpack.c.h.b16 %v971
        %v1013 = vunpack.c.l.b16 %v972
        %v1014 = vunpack.c.h.b16 %v972
        %v1015 = vunpack.c.l.b16 %v973
        %v1016 = vunpack.c.h.b16 %v973
        %v1017 = vunpack.c.l.b16 %v974
        %v1018 = vunpack.c.h.b16 %v974
        %v1019 = vunpack.c.l.b16 %v975
        %v1020 = vunpack.c.h.b16 %v975
        %v1021 = vunpack.c.l.b16 %v976
        %v1022 = vunpack.c.h.b16 %v976
        %v1023 = vunpack.c.l.b16 %v977
        %v1024 = vunpack.c.h.b16 %v977
        %v1025 = vunpack.c.l.b16 %v978
        %v1026 = vunpack.c.h.b16 %v978
        %v1027 = vpack.c.b16 %v995, %v995
        %v1028 = vpack.c.b16 %v996, %v996
        %v1029 = vpack.c.b16 %v997, %v997
        %v1030 = vpack.c.b16 %v998, %v998
        %v1031 = vpack.c.b16 %v999, %v999
        %v1032 = vpack.c.b16 %v1000, %v1000
        %v1033 = vpack.c.b16 %v1001, %v1001
        %v1034 = vpack.c.b16 %v1002, %v1002
        %v1035 = vpack.c.b16 %v1003, %v1003
        %v1036 = vpack.c.b16 %v1004, %v1004
        %v1037 = vpack.c.b16 %v1005, %v1005
        %v1038 = vpack.c.b16 %v1006, %v1006
        %v1039 = vpack.c.b16 %v1007, %v1007
        %v1040 = vpack.c.b16 %v1008, %v1008
        %v1041 = vpack.c.b16 %v1009, %v1009
        %v1042 = vpack.c.b16 %v1010, %v1010
        %v1043 = vpack.c.b16 %v1011, %v1011
        %v1044 = vpack.c.b16 %v1012, %v1012
        %v1045 = vpack.c.b16 %v1013, %v1013
        %v1046 = vpack.c.b16 %v1014, %v1014
        %v1047 = vpack.c.b16 %v1015, %v1015
        %v1048 = vpack.c.b16 %v1016, %v1016
        %v1049 = vpack.c.b16 %v1017, %v1017
        %v1050 = vpack.c.b16 %v1018, %v1018
        %v1051 = vpack.c.b16 %v1019, %v1019
        %v1052 = vpack.c.b16 %v1020, %v1020
        %v1053 = vpack.c.b16 %v1021, %v1021
        %v1054 = vpack.c.b16 %v1022, %v1022
        %v1055 = vpack.c.b16 %v1023, %v1023
        %v1056 = vpack.c.b16 %v1024, %v1024
        %v1057 = vpack.c.b16 %v1025, %v1025
        %v1058 = vpack.c.b16 %v1026, %v1026
        %1091 = vst [vmem:[%s340] sm:$0xf] %v1027
        %1092 = vst [vmem:[%s340 + $0x4] sm:$0xf] %v1028
        %1093 = vst [vmem:[%s340 + $0x8] sm:$0xf] %v1029
        %1094 = vst [vmem:[%s340 + $0xc] sm:$0xf] %v1030
        %1095 = vst [vmem:[%s340 + $0x10] sm:$0xf] %v1031
        %1096 = vst [vmem:[%s340 + $0x14] sm:$0xf] %v1032
        %1097 = vst [vmem:[%s340 + $0x18] sm:$0xf] %v1033
        %1098 = vst [vmem:[%s340 + $0x1c] sm:$0xf] %v1034
        %1099 = vst [vmem:[%s340 + $0x20] sm:$0xf] %v1035
        %1100 = vst [vmem:[%s340 + $0x24] sm:$0xf] %v1036
        %1101 = vst [vmem:[%s340 + $0x28] sm:$0xf] %v1037
        %1102 = vst [vmem:[%s340 + $0x2c] sm:$0xf] %v1038
        %1103 = vst [vmem:[%s340 + $0x30] sm:$0xf] %v1039
        %1104 = vst [vmem:[%s340 + $0x34] sm:$0xf] %v1040
        %1105 = vst [vmem:[%s340 + $0x38] sm:$0xf] %v1041
        %1106 = vst [vmem:[%s340 + $0x3c] sm:$0xf] %v1042
        %1107 = vst [vmem:[%s340 + $0x40] sm:$0xf] %v1043
        %1108 = vst [vmem:[%s340 + $0x44] sm:$0xf] %v1044
        %1109 = vst [vmem:[%s340 + $0x48] sm:$0xf] %v1045
        %1110 = vst [vmem:[%s340 + $0x4c] sm:$0xf] %v1046
        %1111 = vst [vmem:[%s340 + $0x50] sm:$0xf] %v1047
        %1112 = vst [vmem:[%s340 + $0x54] sm:$0xf] %v1048
        %1113 = vst [vmem:[%s340 + $0x58] sm:$0xf] %v1049
        %1114 = vst [vmem:[%s340 + $0x5c] sm:$0xf] %v1050
        %1115 = vst [vmem:[%s340 + $0x60] sm:$0xf] %v1051
        %1116 = vst [vmem:[%s340 + $0x64] sm:$0xf] %v1052
        %1117 = vst [vmem:[%s340 + $0x68] sm:$0xf] %v1053
        %1118 = vst [vmem:[%s340 + $0x6c] sm:$0xf] %v1054
        %1119 = vst [vmem:[%s340 + $0x70] sm:$0xf] %v1055
        %1120 = vst [vmem:[%s340 + $0x74] sm:$0xf] %v1056
        %1121 = vst [vmem:[%s340 + $0x78] sm:$0xf] %v1057
        %1122 = vst [vmem:[%s340 + $0x7c] sm:$0xf] %v1058
        %v1155 = vunpack.c.l.b16 %v482
        %v1156 = vunpack.c.h.b16 %v482
        %v1157 = vunpack.c.l.b16 %v483
        %v1158 = vunpack.c.h.b16 %v483
        %v1159 = vunpack.c.l.b16 %v484
        %v1160 = vunpack.c.h.b16 %v484
        %v1161 = vunpack.c.l.b16 %v485
        %v1162 = vunpack.c.h.b16 %v485
        %v1163 = vunpack.c.l.b16 %v486
        %v1164 = vunpack.c.h.b16 %v486
        %v1165 = vunpack.c.l.b16 %v487
        %v1166 = vunpack.c.h.b16 %v487
        %v1167 = vunpack.c.l.b16 %v488
        %v1168 = vunpack.c.h.b16 %v488
        %v1169 = vunpack.c.l.b16 %v489
        %v1170 = vunpack.c.h.b16 %v489
        %v1171 = vunpack.c.l.b16 %v490
        %v1172 = vunpack.c.h.b16 %v490
        %v1173 = vunpack.c.l.b16 %v491
        %v1174 = vunpack.c.h.b16 %v491
        %v1175 = vunpack.c.l.b16 %v492
        %v1176 = vunpack.c.h.b16 %v492
        %v1177 = vunpack.c.l.b16 %v493
        %v1178 = vunpack.c.h.b16 %v493
        %v1179 = vunpack.c.l.b16 %v494
        %v1180 = vunpack.c.h.b16 %v494
        %v1181 = vunpack.c.l.b16 %v495
        %v1182 = vunpack.c.h.b16 %v495
        %v1183 = vunpack.c.l.b16 %v496
        %v1184 = vunpack.c.h.b16 %v496
        %v1185 = vunpack.c.l.b16 %v497
        %v1186 = vunpack.c.h.b16 %v497
        %v1187 = vunpack.c.l.b16 %v498
        %v1188 = vunpack.c.h.b16 %v498
        %v1189 = vunpack.c.l.b16 %v499
        %v1190 = vunpack.c.h.b16 %v499
        %v1191 = vunpack.c.l.b16 %v500
        %v1192 = vunpack.c.h.b16 %v500
        %v1193 = vunpack.c.l.b16 %v501
        %v1194 = vunpack.c.h.b16 %v501
        %v1195 = vunpack.c.l.b16 %v502
        %v1196 = vunpack.c.h.b16 %v502
        %v1197 = vunpack.c.l.b16 %v503
        %v1198 = vunpack.c.h.b16 %v503
        %v1199 = vunpack.c.l.b16 %v504
        %v1200 = vunpack.c.h.b16 %v504
        %v1201 = vunpack.c.l.b16 %v505
        %v1202 = vunpack.c.h.b16 %v505
        %v1203 = vunpack.c.l.b16 %v506
        %v1204 = vunpack.c.h.b16 %v506
        %v1205 = vunpack.c.l.b16 %v507
        %v1206 = vunpack.c.h.b16 %v507
        %v1207 = vunpack.c.l.b16 %v508
        %v1208 = vunpack.c.h.b16 %v508
        %v1209 = vunpack.c.l.b16 %v509
        %v1210 = vunpack.c.h.b16 %v509
        %v1211 = vunpack.c.l.b16 %v510
        %v1212 = vunpack.c.h.b16 %v510
        %v1213 = vunpack.c.l.b16 %v511
        %v1214 = vunpack.c.h.b16 %v511
        %v1215 = vunpack.c.l.b16 %v512
        %v1216 = vunpack.c.h.b16 %v512
        %v1217 = vunpack.c.l.b16 %v513
        %v1218 = vunpack.c.h.b16 %v513
        %v1219 = vpack.c.b16 %v1157, %v1155
        %v1220 = vpack.c.b16 %v1158, %v1156
        %v1221 = vpack.c.b16 %v1161, %v1159
        %v1222 = vpack.c.b16 %v1162, %v1160
        %v1223 = vpack.c.b16 %v1165, %v1163
        %v1224 = vpack.c.b16 %v1166, %v1164
        %v1225 = vpack.c.b16 %v1169, %v1167
        %v1226 = vpack.c.b16 %v1170, %v1168
        %v1227 = vpack.c.b16 %v1173, %v1171
        %v1228 = vpack.c.b16 %v1174, %v1172
        %v1229 = vpack.c.b16 %v1177, %v1175
        %v1230 = vpack.c.b16 %v1178, %v1176
        %v1231 = vpack.c.b16 %v1181, %v1179
        %v1232 = vpack.c.b16 %v1182, %v1180
        %v1233 = vpack.c.b16 %v1185, %v1183
        %v1234 = vpack.c.b16 %v1186, %v1184
        %v1235 = vpack.c.b16 %v1189, %v1187
        %v1236 = vpack.c.b16 %v1190, %v1188
        %v1237 = vpack.c.b16 %v1193, %v1191
        %v1238 = vpack.c.b16 %v1194, %v1192
        %v1239 = vpack.c.b16 %v1197, %v1195
        %v1240 = vpack.c.b16 %v1198, %v1196
        %v1241 = vpack.c.b16 %v1201, %v1199
        %v1242 = vpack.c.b16 %v1202, %v1200
        %v1243 = vpack.c.b16 %v1205, %v1203
        %v1244 = vpack.c.b16 %v1206, %v1204
        %v1245 = vpack.c.b16 %v1209, %v1207
        %v1246 = vpack.c.b16 %v1210, %v1208
        %v1247 = vpack.c.b16 %v1213, %v1211
        %v1248 = vpack.c.b16 %v1214, %v1212
        %v1249 = vpack.c.b16 %v1217, %v1215
        %v1250 = vpack.c.b16 %v1218, %v1216
        %1283 = vmatprep.subr.bf16.mxu0 0
        %1284 = vmatpush1.bf16.msra.mxu0 %v745
        %1285 = vmatprep.subr.bf16.mxu0 0
        %1286 = vmatpush1.bf16.msra.mxu0 %v744
        %1287 = vmatprep.subr.bf16.mxu0 0
        %1288 = vmatpush1.bf16.msra.mxu0 %v743
        %1289 = vmatprep.subr.bf16.mxu0 0
        %1290 = vmatpush1.bf16.msra.mxu0 %v742
        %1291 = vmatprep.subr.bf16.mxu0 0
        %1292 = vmatpush1.bf16.msra.mxu0 %v741
        %1293 = vmatprep.subr.bf16.mxu0 0
        %1294 = vmatpush1.bf16.msra.mxu0 %v740
        %1295 = vmatprep.subr.bf16.mxu0 0
        %1296 = vmatpush1.bf16.msra.mxu0 %v739
        %1297 = vmatprep.subr.bf16.mxu0 0
        %1298 = vmatpush1.bf16.msra.mxu0 %v738
        %1299 = vmatprep.subr.bf16.mxu0 0
        %1300 = vmatpush2.bf16.msra.mxu0 %v753
        %1301 = vmatprep.subr.bf16.mxu0 0
        %1302 = vmatpush2.bf16.msra.mxu0 %v752
        %1303 = vmatprep.subr.bf16.mxu0 0
        %1304 = vmatpush2.bf16.msra.mxu0 %v751
        %1305 = vmatprep.subr.bf16.mxu0 0
        %1306 = vmatpush2.bf16.msra.mxu0 %v750
        %1307 = vmatprep.subr.bf16.mxu0 0
        %1308 = vmatpush2.bf16.msra.mxu0 %v749
        %1309 = vmatprep.subr.bf16.mxu0 0
        %1310 = vmatpush2.bf16.msra.mxu0 %v748
        %1311 = vmatprep.subr.bf16.mxu0 0
        %1312 = vmatpush2.bf16.msra.mxu0 %v747
        %1313 = vmatprep.subr.bf16.mxu0 0
        %1314 = vmatpush2.bf16.msra.mxu0 %v746
        %1315 = vmatprep.mubr.bf16.mxu0 %v1220
        %1316 = vmatmul.mubr.bf16.gmra.mxu0 %v1219
        %v1317 = vpop.f32.mrf.mxu0
        %v1318 = vadd.f32 %v418, %v1317
        %v1319 = vpop.f32.mrf.mxu0
        %v1320 = vpop.f32.mrf.mxu0
        %v1321 = vadd.f32 %v419, %v1320
        %v1322 = vpop.f32.mrf.mxu0
        %1323 = vmatprep.mubr.bf16.mxu0 %v1222
        %1324 = vmatmul.mubr.bf16.gmra.mxu0 %v1221
        %v1325 = vpop.f32.mrf.mxu0
        %v1326 = vadd.f32 %v420, %v1325
        %v1327 = vpop.f32.mrf.mxu0
        %v1328 = vpop.f32.mrf.mxu0
        %v1329 = vadd.f32 %v421, %v1328
        %v1330 = vpop.f32.mrf.mxu0
        %1331 = vmatprep.mubr.bf16.mxu0 %v1224
        %1332 = vmatmul.mubr.bf16.gmra.mxu0 %v1223
        %v1333 = vpop.f32.mrf.mxu0
        %v1334 = vadd.f32 %v422, %v1333
        %v1335 = vpop.f32.mrf.mxu0
        %v1336 = vpop.f32.mrf.mxu0
        %v1337 = vadd.f32 %v423, %v1336
        %v1338 = vpop.f32.mrf.mxu0
        %1339 = vmatprep.mubr.bf16.mxu0 %v1226
        %1340 = vmatmul.mubr.bf16.gmra.mxu0 %v1225
        %v1341 = vpop.f32.mrf.mxu0
        %v1342 = vadd.f32 %v424, %v1341
        %v1343 = vpop.f32.mrf.mxu0
        %v1344 = vpop.f32.mrf.mxu0
        %v1345 = vadd.f32 %v425, %v1344
        %v1346 = vpop.f32.mrf.mxu0
        %1347 = vmatprep.mubr.bf16.mxu0 %v1228
        %1348 = vmatmul.mubr.bf16.gmra.mxu0 %v1227
        %v1349 = vpop.f32.mrf.mxu0
        %v1350 = vadd.f32 %v426, %v1349
        %v1351 = vpop.f32.mrf.mxu0
        %v1352 = vpop.f32.mrf.mxu0
        %v1353 = vadd.f32 %v427, %v1352
        %v1354 = vpop.f32.mrf.mxu0
        %1355 = vmatprep.mubr.bf16.mxu0 %v1230
        %1356 = vmatmul.mubr.bf16.gmra.mxu0 %v1229
        %v1357 = vpop.f32.mrf.mxu0
        %v1358 = vadd.f32 %v428, %v1357
        %v1359 = vpop.f32.mrf.mxu0
        %v1360 = vpop.f32.mrf.mxu0
        %v1361 = vadd.f32 %v429, %v1360
        %v1362 = vpop.f32.mrf.mxu0
        %1363 = vmatprep.mubr.bf16.mxu0 %v1232
        %1364 = vmatmul.mubr.bf16.gmra.mxu0 %v1231
        %v1365 = vpop.f32.mrf.mxu0
        %v1366 = vadd.f32 %v430, %v1365
        %v1367 = vpop.f32.mrf.mxu0
        %v1368 = vpop.f32.mrf.mxu0
        %v1369 = vadd.f32 %v431, %v1368
        %v1370 = vpop.f32.mrf.mxu0
        %1371 = vmatprep.mubr.bf16.mxu0 %v1234
        %1372 = vmatmul.mubr.bf16.gmra.mxu0 %v1233
        %v1373 = vpop.f32.mrf.mxu0
        %v1374 = vadd.f32 %v432, %v1373
        %v1375 = vpop.f32.mrf.mxu0
        %v1376 = vpop.f32.mrf.mxu0
        %v1377 = vadd.f32 %v433, %v1376
        %v1378 = vpop.f32.mrf.mxu0
        %1379 = vmatprep.mubr.bf16.mxu0 %v1236
        %1380 = vmatmul.mubr.bf16.gmra.mxu0 %v1235
        %v1381 = vpop.f32.mrf.mxu0
        %v1382 = vadd.f32 %v434, %v1381
        %v1383 = vpop.f32.mrf.mxu0
        %v1384 = vpop.f32.mrf.mxu0
        %v1385 = vadd.f32 %v435, %v1384
        %v1386 = vpop.f32.mrf.mxu0
        %1387 = vmatprep.mubr.bf16.mxu0 %v1238
        %1388 = vmatmul.mubr.bf16.gmra.mxu0 %v1237
        %v1389 = vpop.f32.mrf.mxu0
        %v1390 = vadd.f32 %v436, %v1389
        %v1391 = vpop.f32.mrf.mxu0
        %v1392 = vpop.f32.mrf.mxu0
        %v1393 = vadd.f32 %v437, %v1392
        %v1394 = vpop.f32.mrf.mxu0
        %1395 = vmatprep.mubr.bf16.mxu0 %v1240
        %1396 = vmatmul.mubr.bf16.gmra.mxu0 %v1239
        %v1397 = vpop.f32.mrf.mxu0
        %v1398 = vadd.f32 %v438, %v1397
        %v1399 = vpop.f32.mrf.mxu0
        %v1400 = vpop.f32.mrf.mxu0
        %v1401 = vadd.f32 %v439, %v1400
        %v1402 = vpop.f32.mrf.mxu0
        %1403 = vmatprep.mubr.bf16.mxu0 %v1242
        %1404 = vmatmul.mubr.bf16.gmra.mxu0 %v1241
        %v1405 = vpop.f32.mrf.mxu0
        %v1406 = vadd.f32 %v440, %v1405
        %v1407 = vpop.f32.mrf.mxu0
        %v1408 = vpop.f32.mrf.mxu0
        %v1409 = vadd.f32 %v441, %v1408
        %v1410 = vpop.f32.mrf.mxu0
        %1411 = vmatprep.mubr.bf16.mxu0 %v1244
        %1412 = vmatmul.mubr.bf16.gmra.mxu0 %v1243
        %v1413 = vpop.f32.mrf.mxu0
        %v1414 = vadd.f32 %v442, %v1413
        %v1415 = vpop.f32.mrf.mxu0
        %v1416 = vpop.f32.mrf.mxu0
        %v1417 = vadd.f32 %v443, %v1416
        %v1418 = vpop.f32.mrf.mxu0
        %1419 = vmatprep.mubr.bf16.mxu0 %v1246
        %1420 = vmatmul.mubr.bf16.gmra.mxu0 %v1245
        %v1421 = vpop.f32.mrf.mxu0
        %v1422 = vadd.f32 %v444, %v1421
        %v1423 = vpop.f32.mrf.mxu0
        %v1424 = vpop.f32.mrf.mxu0
        %v1425 = vadd.f32 %v445, %v1424
        %v1426 = vpop.f32.mrf.mxu0
        %1427 = vmatprep.mubr.bf16.mxu0 %v1248
        %1428 = vmatmul.mubr.bf16.gmra.mxu0 %v1247
        %v1429 = vpop.f32.mrf.mxu0
        %v1430 = vadd.f32 %v446, %v1429
        %v1431 = vpop.f32.mrf.mxu0
        %v1432 = vpop.f32.mrf.mxu0
        %v1433 = vadd.f32 %v447, %v1432
        %v1434 = vpop.f32.mrf.mxu0
        %1435 = vmatprep.mubr.bf16.mxu0 %v1250
        %1436 = vmatmul.mubr.bf16.gmra.mxu0 %v1249
        %v1437 = vpop.f32.mrf.mxu0
        %v1438 = vadd.f32 %v448, %v1437
        %v1439 = vpop.f32.mrf.mxu0
        %v1440 = vpop.f32.mrf.mxu0
        %v1441 = vadd.f32 %v449, %v1440
        %v1442 = vpop.f32.mrf.mxu0
        %1443 = vdwg.mxu0
        %v1444 = vmax.f32 %v1318, 0.0
        %v1445 = vmax.f32 %v1321, 0.0
        %v1446 = vmax.f32 %v1326, 0.0
        %v1447 = vmax.f32 %v1329, 0.0
        %v1448 = vmax.f32 %v1334, 0.0
        %v1449 = vmax.f32 %v1337, 0.0
        %v1450 = vmax.f32 %v1342, 0.0
        %v1451 = vmax.f32 %v1345, 0.0
        %v1452 = vmax.f32 %v1350, 0.0
        %v1453 = vmax.f32 %v1353, 0.0
        %v1454 = vmax.f32 %v1358, 0.0
        %v1455 = vmax.f32 %v1361, 0.0
        %v1456 = vmax.f32 %v1366, 0.0
        %v1457 = vmax.f32 %v1369, 0.0
        %v1458 = vmax.f32 %v1374, 0.0
        %v1459 = vmax.f32 %v1377, 0.0
        %v1460 = vmax.f32 %v1382, 0.0
        %v1461 = vmax.f32 %v1385, 0.0
        %v1462 = vmax.f32 %v1390, 0.0
        %v1463 = vmax.f32 %v1393, 0.0
        %v1464 = vmax.f32 %v1398, 0.0
        %v1465 = vmax.f32 %v1401, 0.0
        %v1466 = vmax.f32 %v1406, 0.0
        %v1467 = vmax.f32 %v1409, 0.0
        %v1468 = vmax.f32 %v1414, 0.0
        %v1469 = vmax.f32 %v1417, 0.0
        %v1470 = vmax.f32 %v1422, 0.0
        %v1471 = vmax.f32 %v1425, 0.0
        %v1472 = vmax.f32 %v1430, 0.0
        %v1473 = vmax.f32 %v1433, 0.0
        %v1474 = vmax.f32 %v1438, 0.0
        %v1475 = vmax.f32 %v1441, 0.0
        %v1476 = vpack.c.bf16 %v1445, %v1444
        %v1477 = vpack.c.bf16 %v1447, %v1446
        %v1478 = vpack.c.bf16 %v1449, %v1448
        %v1479 = vpack.c.bf16 %v1451, %v1450
        %v1480 = vpack.c.bf16 %v1453, %v1452
        %v1481 = vpack.c.bf16 %v1455, %v1454
        %v1482 = vpack.c.bf16 %v1457, %v1456
        %v1483 = vpack.c.bf16 %v1459, %v1458
        %v1484 = vpack.c.bf16 %v1461, %v1460
        %v1485 = vpack.c.bf16 %v1463, %v1462
        %v1486 = vpack.c.bf16 %v1465, %v1464
        %v1487 = vpack.c.bf16 %v1467, %v1466
        %v1488 = vpack.c.bf16 %v1469, %v1468
        %v1489 = vpack.c.bf16 %v1471, %v1470
        %v1490 = vpack.c.bf16 %v1473, %v1472
        %v1491 = vpack.c.bf16 %v1475, %v1474
        %v1508 = vunpack.c.l.b16 %v1476
        %v1509 = vunpack.c.h.b16 %v1476
        %v1510 = vunpack.c.l.b16 %v1477
        %v1511 = vunpack.c.h.b16 %v1477
        %v1512 = vunpack.c.l.b16 %v1478
        %v1513 = vunpack.c.h.b16 %v1478
        %v1514 = vunpack.c.l.b16 %v1479
        %v1515 = vunpack.c.h.b16 %v1479
        %v1516 = vunpack.c.l.b16 %v1480
        %v1517 = vunpack.c.h.b16 %v1480
        %v1518 = vunpack.c.l.b16 %v1481
        %v1519 = vunpack.c.h.b16 %v1481
        %v1520 = vunpack.c.l.b16 %v1482
        %v1521 = vunpack.c.h.b16 %v1482
        %v1522 = vunpack.c.l.b16 %v1483
        %v1523 = vunpack.c.h.b16 %v1483
        %v1524 = vunpack.c.l.b16 %v1484
        %v1525 = vunpack.c.h.b16 %v1484
        %v1526 = vunpack.c.l.b16 %v1485
        %v1527 = vunpack.c.h.b16 %v1485
        %v1528 = vunpack.c.l.b16 %v1486
        %v1529 = vunpack.c.h.b16 %v1486
        %v1530 = vunpack.c.l.b16 %v1487
        %v1531 = vunpack.c.h.b16 %v1487
        %v1532 = vunpack.c.l.b16 %v1488
        %v1533 = vunpack.c.h.b16 %v1488
        %v1534 = vunpack.c.l.b16 %v1489
        %v1535 = vunpack.c.h.b16 %v1489
        %v1536 = vunpack.c.l.b16 %v1490
        %v1537 = vunpack.c.h.b16 %v1490
        %v1538 = vunpack.c.l.b16 %v1491
        %v1539 = vunpack.c.h.b16 %v1491
        %v1540 = vpack.c.b16 %v1508, %v1508
        %v1541 = vpack.c.b16 %v1509, %v1509
        %v1542 = vpack.c.b16 %v1510, %v1510
        %v1543 = vpack.c.b16 %v1511, %v1511
        %v1544 = vpack.c.b16 %v1512, %v1512
        %v1545 = vpack.c.b16 %v1513, %v1513
        %v1546 = vpack.c.b16 %v1514, %v1514
        %v1547 = vpack.c.b16 %v1515, %v1515
        %v1548 = vpack.c.b16 %v1516, %v1516
        %v1549 = vpack.c.b16 %v1517, %v1517
        %v1550 = vpack.c.b16 %v1518, %v1518
        %v1551 = vpack.c.b16 %v1519, %v1519
        %v1552 = vpack.c.b16 %v1520, %v1520
        %v1553 = vpack.c.b16 %v1521, %v1521
        %v1554 = vpack.c.b16 %v1522, %v1522
        %v1555 = vpack.c.b16 %v1523, %v1523
        %v1556 = vpack.c.b16 %v1524, %v1524
        %v1557 = vpack.c.b16 %v1525, %v1525
        %v1558 = vpack.c.b16 %v1526, %v1526
        %v1559 = vpack.c.b16 %v1527, %v1527
        %v1560 = vpack.c.b16 %v1528, %v1528
        %v1561 = vpack.c.b16 %v1529, %v1529
        %v1562 = vpack.c.b16 %v1530, %v1530
        %v1563 = vpack.c.b16 %v1531, %v1531
        %v1564 = vpack.c.b16 %v1532, %v1532
        %v1565 = vpack.c.b16 %v1533, %v1533
        %v1566 = vpack.c.b16 %v1534, %v1534
        %v1567 = vpack.c.b16 %v1535, %v1535
        %v1568 = vpack.c.b16 %v1536, %v1536
        %v1569 = vpack.c.b16 %v1537, %v1537
        %v1570 = vpack.c.b16 %v1538, %v1538
        %v1571 = vpack.c.b16 %v1539, %v1539
        %1604 = vst [vmem:[%s347] sm:$0xf] %v1540
        %1605 = vst [vmem:[%s347 + $0x4] sm:$0xf] %v1541
        %1606 = vst [vmem:[%s347 + $0x8] sm:$0xf] %v1542
        %1607 = vst [vmem:[%s347 + $0xc] sm:$0xf] %v1543
        %1608 = vst [vmem:[%s347 + $0x10] sm:$0xf] %v1544
        %1609 = vst [vmem:[%s347 + $0x14] sm:$0xf] %v1545
        %1610 = vst [vmem:[%s347 + $0x18] sm:$0xf] %v1546
        %1611 = vst [vmem:[%s347 + $0x1c] sm:$0xf] %v1547
        %1612 = vst [vmem:[%s347 + $0x20] sm:$0xf] %v1548
        %1613 = vst [vmem:[%s347 + $0x24] sm:$0xf] %v1549
        %1614 = vst [vmem:[%s347 + $0x28] sm:$0xf] %v1550
        %1615 = vst [vmem:[%s347 + $0x2c] sm:$0xf] %v1551
        %1616 = vst [vmem:[%s347 + $0x30] sm:$0xf] %v1552
        %1617 = vst [vmem:[%s347 + $0x34] sm:$0xf] %v1553
        %1618 = vst [vmem:[%s347 + $0x38] sm:$0xf] %v1554
        %1619 = vst [vmem:[%s347 + $0x3c] sm:$0xf] %v1555
        %1620 = vst [vmem:[%s347 + $0x40] sm:$0xf] %v1556
        %1621 = vst [vmem:[%s347 + $0x44] sm:$0xf] %v1557
        %1622 = vst [vmem:[%s347 + $0x48] sm:$0xf] %v1558
        %1623 = vst [vmem:[%s347 + $0x4c] sm:$0xf] %v1559
        %1624 = vst [vmem:[%s347 + $0x50] sm:$0xf] %v1560
        %1625 = vst [vmem:[%s347 + $0x54] sm:$0xf] %v1561
        %1626 = vst [vmem:[%s347 + $0x58] sm:$0xf] %v1562
        %1627 = vst [vmem:[%s347 + $0x5c] sm:$0xf] %v1563
        %1628 = vst [vmem:[%s347 + $0x60] sm:$0xf] %v1564
        %1629 = vst [vmem:[%s347 + $0x64] sm:$0xf] %v1565
        %1630 = vst [vmem:[%s347 + $0x68] sm:$0xf] %v1566
        %1631 = vst [vmem:[%s347 + $0x6c] sm:$0xf] %v1567
        %1632 = vst [vmem:[%s347 + $0x70] sm:$0xf] %v1568
        %1633 = vst [vmem:[%s347 + $0x74] sm:$0xf] %v1569
        %1634 = vst [vmem:[%s347 + $0x78] sm:$0xf] %v1570
        %1635 = vst [vmem:[%s347 + $0x7c] sm:$0xf] %v1571
        %s1636 = sand.u32 %s137, 1
        %s1637 = scalar_lea.sflag [#allocation4], %s1636
        %s1638 = sand.u32 %s137, 1
        %s1639 = smul.addr %s1638, 128
        %s1640 = scalar_lea.vmem [#allocation10], %s1639
        %s1641 = sand.u32 %s163, 1
        %s1642 = scalar_lea.sflag [#allocation12], %s1641
        %s1643 = sand.u32 %s163, 1
        %s1644 = smul.addr %s1643, 128
        %s1645 = scalar_lea.vmem [#allocation11], %s1644
        // Predicated region
        $region53: #{tpu_custom_call.1} parent=35 // pred_check
          %p1646 = pneg %p147
        $region54: #{tpu_custom_call.1} parent=35 // pred_check_branch
          %1648 = sbr.rel (%p1646) target = $region56
        $region55: #{tpu_custom_call.1} parent=35 // pred_region
          %s1649 = smul.u32 32, %s30
          %s1651 = ssub.s32 2048, 2048
          %1652 = vsyncadd %s1637, %s1651
          %s1653 = smul.addr %s1649, 64
          %s1654 = scalar_lea.hbm %s4, %s1653
          %s1655 = sshll.u32 %s1640, 4
          %s1656 = int_to_ptr.vmem [resolvable:$true] %s1655
          %1661 = dma.vmem_to_hbm [thread:$0]  %s1656, 2048, %s1654, %s1637, 64, 64, 4
        $region56: #{tpu_custom_call.1} parent=35 // pred_fallthru
          _
        // Predicated region
        $region57: #{tpu_custom_call.1} parent=35 // pred_check
          %p1662 = pneg %p173
        $region58: #{tpu_custom_call.1} parent=35 // pred_check_branch
          %1664 = sbr.rel (%p1662) target = $region60
        $region59: #{tpu_custom_call.1} parent=35 // pred_region
          %s1665 = smul.u32 32, %s30
          %s1667 = ssub.s32 2048, 2048
          %1668 = vsyncadd %s1642, %s1667
          %s1669 = smul.addr %s1665, 64
          %s1670 = scalar_lea.hbm %s5, %s1669
          %s1671 = sshll.u32 %s1645, 4
          %s1672 = int_to_ptr.vmem [resolvable:$true] %s1671
          %1677 = dma.vmem_to_hbm [thread:$0]  %s1672, 2048, %s1670, %s1642, 64, 64, 4
        $region60: #{tpu_custom_call.1} parent=35 // pred_fallthru
          _
      $region36: #{tpu_custom_call.1} parent=5 // pred_fallthru
        _
      %p1678 = scmp.le.s32.totalorder 2, %s25
      // Predicated region
      $region61: #{tpu_custom_call.1} parent=5 // pred_check
        %p1679 = pneg %p1678
      $region62: #{tpu_custom_call.1} parent=5 // pred_check_branch
        %1681 = sbr.rel (%p1679) target = $region64
      $region63: #{tpu_custom_call.1} parent=5 // pred_region
        %s1682 = ssub.s32 %s25, 2
        // Predicated region
        $region65: #{tpu_custom_call.1} parent=63 // pred_check
          %p1683 = pneg %p153
        $region66: #{tpu_custom_call.1} parent=63 // pred_check_branch
          %1685 = sbr.rel (%p1683) target = $region68
        $region67: #{tpu_custom_call.1} parent=63 // pred_region
          %s1686 = sand.u32 %s138, 1
          %s1687 = scalar_lea.sflag [#allocation4], %s1686
          %s1688 = sand.u32 %s138, 1
          %s1689 = smul.addr %s1688, 128
          %s1690 = scalar_lea.vmem [#allocation10], %s1689
          %1691 = dma.done %s1687, 2048
        $region68: #{tpu_custom_call.1} parent=63 // pred_fallthru
          _
        // Predicated region
        $region69: #{tpu_custom_call.1} parent=63 // pred_check
          %p1692 = pneg %p179
        $region70: #{tpu_custom_call.1} parent=63 // pred_check_branch
          %1694 = sbr.rel (%p1692) target = $region72
        $region71: #{tpu_custom_call.1} parent=63 // pred_region
          %s1695 = sand.u32 %s164, 1
          %s1696 = scalar_lea.sflag [#allocation12], %s1695
          %s1697 = sand.u32 %s164, 1
          %s1698 = smul.addr %s1697, 128
          %s1699 = scalar_lea.vmem [#allocation11], %s1698
          %1700 = dma.done %s1696, 2048
        $region72: #{tpu_custom_call.1} parent=63 // pred_fallthru
          _
      $region64: #{tpu_custom_call.1} parent=5 // pred_fallthru
        _
    $region6: #{tpu_custom_call.1} parent=1 // loop_footer
      %s29 = sadd.s32 1, %s25
    $region7: #{tpu_custom_call.1} parent=1 // loop_footer_branch
      %24 = sbr.rel target = $region3
    $region8: #{tpu_custom_call.1} parent=1 // loop_exit
      _
    %1701 = vsyncpa [#allocation3], 1
    %s1702 = scalar_lea.sflag [#allocation3], 1
    %1703 = vsyncpa %s1702, 1
    %1704 = vsyncpa [#allocation6], 1
    %s1705 = scalar_lea.sflag [#allocation6], 1
    %1706 = vsyncpa %s1705, 1
    %1707 = vsyncpa [#allocation9], 1
    %s1708 = scalar_lea.sflag [#allocation9], 1
    %1709 = vsyncpa %s1708, 1
    %1710 = vsyncpa [#allocation4], 1
    %s1711 = scalar_lea.sflag [#allocation4], 1
    %1712 = vsyncpa %s1711, 1
    %1713 = vsyncpa [#allocation12], 1
    %s1714 = scalar_lea.sflag [#allocation12], 1
    %1715 = vsyncpa %s1714, 1

</llo_original>
